<compile_context>
chip_gen: v5e
topology: v5e:2x2
jax: 0.10.0
libtpu: 0.0.40
codegen_flags: <defaults>
</compile_context>

<pallas_src>
import functools

import jax
import jax.numpy as jnp
from jax import lax
from jax.experimental import pallas as pl
from jax.experimental.pallas import tpu as pltpu


def _rotate_kernel(x_ref, m_ref, o_ref, *, patch):
    # x_ref, o_ref: (C, G, P, W)  NCHW slab: G = GH-tile, P = intra-patch rows,
    #                             W = full image width = GW * P (lanes).
    # m_ref:        (G, 1, W) int32, nonzero => transpose the patch owning that lane.
    P = patch
    x = x_ref[...]
    W = x.shape[-1]

    pm = m_ref[...] != 0                                    # (G, 1, W)

    lane = lax.broadcasted_iota(jnp.int32, (1, P, W), 2)    # j (lane index)
    row = lax.broadcasted_iota(jnp.int32, (1, P, W), 1)     # a (intra-patch row)
    band = lane % P - row                                   # (j % P) - a
    # Sentinel P never equals any tested offset s, so un-rotated patches keep x.
    bandm = jnp.where(pm, band, jnp.int32(P))               # (G, P, W)

    # Per-patch transpose: out[a, gw*P + d] = x[d, gw*P + a].
    # For the diagonal band s = d - a the source element sits at
    # (row a + s, lane j - s); realize that with one lane roll + one sublane
    # roll of the whole block, then merge on the band mask.  Wrapped (garbage)
    # positions are never selected by the mask.  s = 0 is the transpose-invariant
    # diagonal and is skipped (out starts as x).
    out = x
    for s in range(-(P - 1), P):
        if s == 0:
            continue
        z = pltpu.roll(x, s % W, axis=3)         # lanes:    src lane = j - s
        z = pltpu.roll(z, (-s) % P, axis=2)      # sublanes: src row  = a + s
        out = jnp.where(bandm == s, z, out)      # broadcasts over leading C
    o_ref[...] = out


def _largest_divisor_at_most(n, cap):
    cap = max(1, min(n, cap))
    for d in range(cap, 0, -1):
        if n % d == 0:
            return d
    return 1


def patch_embed_rotate(x, mask, patch_size):
    """x: (B, C, H, W) NCHW.  mask: (B, GH, GW), nonzero => transpose that patch
    (Bernoulli(p) sampled outside, shared across channels like the reference)."""
    B, C, H, W = x.shape
    P = patch_size
    assert H % P == 0 and W % P == 0, "image size must be divisible by patch size"
    GH, GW = H // P, W // P

    # Free (metadata-only) reshape: split H into (GH, P).  No transpose passes.
    x5 = x.reshape(B, C, GH, P, W)

    # Per-lane patch mask: lane j of width W belongs to patch gw = j // P.
    m4 = jnp.repeat(mask.astype(jnp.int32), P, axis=-1).reshape(B, GH, 1, W)

    # GH-tile size: big enough to amortize per-grid-step overhead, small enough
    # to stay well inside scoped VMEM; keep >= 2 grid steps when B == 1 so both
    # v7x TensorCores get work.
    strip_bytes = C * P * W * x.dtype.itemsize
    cap = max(1, (2 * 1024 * 1024) // strip_bytes)
    if B == 1 and GH > 1:
        cap = min(cap, max(1, GH // 2))
    gh_blk = _largest_divisor_at_most(GH, cap)
    n_gh = GH // gh_blk

    kern = functools.partial(_rotate_kernel, patch=P)
    out5 = pl.pallas_call(
        kern,
        out_shape=jax.ShapeDtypeStruct((B, C, GH, P, W), x.dtype),
        grid_spec=pltpu.PrefetchScalarGridSpec(
            num_scalar_prefetch=0,
            grid=(B, n_gh),
            in_specs=[
                pl.BlockSpec((None, C, gh_blk, P, W),
                             lambda b, t: (b, 0, t, 0, 0)),
                pl.BlockSpec((None, gh_blk, 1, W),
                             lambda b, t: (b, t, 0, 0)),
            ],
            out_specs=pl.BlockSpec((None, C, gh_blk, P, W),
                                   lambda b, t: (b, 0, t, 0, 0)),
        ),
        compiler_params=pltpu.CompilerParams(
            dimension_semantics=("parallel", "parallel")),
    )(x5, m4)

    # Free reshape back to NCHW.
    return out5.reshape(B, C, H, W)


def reference(x, mask, patch_size):
    """Pure-JAX reference of the PyTorch forward (given the same Bernoulli mask)."""
    B, C, H, W = x.shape
    P = patch_size
    GH, GW = H // P, W // P
    x6 = x.reshape(B, C, GH, P, GW, P)
    xt = jnp.swapaxes(x6, 3, 5)  # every patch transposed
    m = mask.astype(bool)[:, None, :, None, :, None]
    return jnp.where(m, xt, x6).reshape(B, C, H, W)


if __name__ == "__main__":
    # TODO(synk): torch's per-patch Bernoulli sampling loop order is not
    # bit-reproducible in JAX; the per-(batch, patch) Bernoulli(p) mask is
    # sampled with jax.random instead and passed in.
    key = jax.random.PRNGKey(0)

    def run_case(k, B, C, H, W, P, p=0.5):
        kx, km = jax.random.split(k)
        GH, GW = H // P, W // P
        x = jax.random.normal(kx, (B, C, H, W), dtype=jnp.float32)
        mask = jax.random.bernoulli(km, p, (B, GH, GW)).astype(jnp.int32)
        out = jax.block_until_ready(patch_embed_rotate(x, mask, P))
        ref = reference(x, mask, P)
        assert out.shape == x.shape and out.dtype == x.dtype
        assert jnp.array_equal(out, ref), (
            f"kernel mismatch vs reference for B={B},C={C},H={H},W={W},P={P}")

    k1, k2, k3 = jax.random.split(key, 3)
    run_case(k1, B=2, C=3, H=32, W=32, P=8)   # baseline small case
    run_case(k2, B=1, C=3, H=32, W=32, P=8)   # B=1 -> GH axis tiled into 2 grid steps
    run_case(k3, B=2, C=4, H=16, W=32, P=8)   # rectangular image, different C

    print("KERNEL_OK")
</pallas_src>

<mosaic_0001>
module attributes {stable_mosaic.version = 11 : i64} {
  func.func @_rotate_kernel(%arg0: i32, %arg1: i32, %arg2: memref<1x3x4x8x32xf32, #tpu.memory_space<vmem>>, %arg3: memref<1x4x1x32xi32, #tpu.memory_space<vmem>>, %arg4: memref<1x3x4x8x32xf32, #tpu.memory_space<vmem>>) attributes {dimension_semantics = [#tpu.dimension_semantics<parallel>, #tpu.dimension_semantics<parallel>], iteration_bounds = array<i64: 2, 1>, scalar_prefetch = 0 : i64, scratch_operands = 0 : i64, tpu.core_type = #tpu.core_type<tc>, window_params = [{transform_indices = @transform_0, window_bounds = array<i64: 1, 3, 4, 8, 32>}, {transform_indices = @transform_1, window_bounds = array<i64: 1, 4, 1, 32>}, {transform_indices = @transform_2, window_bounds = array<i64: 1, 3, 4, 8, 32>}]} {
    %c0 = arith.constant 0 : index
    %c0_0 = arith.constant 0 : index
    %c0_1 = arith.constant 0 : index
    %c0_2 = arith.constant 0 : index
    %c0_3 = arith.constant 0 : index
    %0 = vector.load %arg2[%c0, %c0_0, %c0_1, %c0_2, %c0_3] : memref<1x3x4x8x32xf32, #tpu.memory_space<vmem>>, vector<1x3x4x8x32xf32>
    %1 = vector.shape_cast %0 : vector<1x3x4x8x32xf32> to vector<3x4x8x32xf32>
    %c0_4 = arith.constant 0 : index
    %c0_5 = arith.constant 0 : index
    %c0_6 = arith.constant 0 : index
    %c0_7 = arith.constant 0 : index
    %2 = vector.load %arg3[%c0_4, %c0_5, %c0_6, %c0_7] : memref<1x4x1x32xi32, #tpu.memory_space<vmem>>, vector<1x4x1x32xi32>
    %3 = vector.shape_cast %2 : vector<1x4x1x32xi32> to vector<4x1x32xi32>
    %c0_i32 = arith.constant 0 : i32
    %4 = vector.broadcast %c0_i32 : i32 to vector<4x1x32xi32>
    %5 = arith.cmpi ne, %3, %4 : vector<4x1x32xi32>
    %6 = tpu.iota {dimensions = array<i32: 2>} : vector<1x8x32xi32>
    %7 = tpu.iota {dimensions = array<i32: 1>} : vector<1x8x32xi32>
    %c8_i32 = arith.constant 8 : i32
    %c0_i32_8 = arith.constant 0 : i32
    %8 = arith.cmpi eq, %c8_i32, %c0_i32_8 : i32
    %c1_i32 = arith.constant 1 : i32
    %9 = arith.select %8, %c1_i32, %c8_i32 : i32
    %10 = vector.broadcast %9 : i32 to vector<1x8x32xi32>
    %11 = arith.remsi %6, %10 : vector<1x8x32xi32>
    %c0_i32_9 = arith.constant 0 : i32
    %12 = vector.broadcast %c0_i32_9 : i32 to vector<1x8x32xi32>
    %13 = arith.cmpi ne, %11, %12 : vector<1x8x32xi32>
    %c0_i32_10 = arith.constant 0 : i32
    %14 = vector.broadcast %c0_i32_10 : i32 to vector<1x8x32xi32>
    %15 = arith.cmpi slt, %11, %14 : vector<1x8x32xi32>
    %c0_i32_11 = arith.constant 0 : i32
    %16 = arith.cmpi slt, %9, %c0_i32_11 : i32
    %17 = vector.broadcast %16 : i1 to vector<1x8x32xi1>
    %18 = vector.broadcast %17 : vector<1x8x32xi1> to vector<1x8x32xi1>
    %19 = arith.xori %15, %18 : vector<1x8x32xi1>
    %20 = arith.andi %19, %13 : vector<1x8x32xi1>
    %21 = vector.broadcast %9 : i32 to vector<1x8x32xi32>
    %22 = arith.addi %11, %21 : vector<1x8x32xi32>
    %23 = arith.select %20, %22, %11 : vector<1x8x32xi1>, vector<1x8x32xi32>
    %24 = arith.subi %23, %7 : vector<1x8x32xi32>
    %c8_i32_12 = arith.constant 8 : i32
    %25 = vector.shape_cast %5 : vector<4x1x32xi1> to vector<4x1x32xi1>
    %26 = vector.broadcast %25 : vector<4x1x32xi1> to vector<4x8x32xi1>
    %27 = vector.shape_cast %24 : vector<1x8x32xi32> to vector<1x8x32xi32>
    %28 = vector.broadcast %27 : vector<1x8x32xi32> to vector<4x8x32xi32>
    %29 = vector.broadcast %c8_i32_12 : i32 to vector<4x8x32xi32>
    %30 = arith.select %26, %28, %29 : vector<4x8x32xi1>, vector<4x8x32xi32>
    %c25_i32 = arith.constant 25 : i32
    %31 = tpu.dynamic_rotate %1 by %c25_i32 dim 3 : vector<3x4x8x32xf32>, i32 -> vector<3x4x8x32xf32>
    %c7_i32 = arith.constant 7 : i32
    %32 = tpu.dynamic_rotate %31 by %c7_i32 dim 2 : vector<3x4x8x32xf32>, i32 -> vector<3x4x8x32xf32>
    %c-7_i32 = arith.constant -7 : i32
    %33 = vector.broadcast %c-7_i32 : i32 to vector<4x8x32xi32>
    %34 = arith.cmpi eq, %30, %33 : vector<4x8x32xi32>
    %35 = vector.shape_cast %34 : vector<4x8x32xi1> to vector<1x4x8x32xi1>
    %36 = vector.broadcast %35 : vector<1x4x8x32xi1> to vector<3x4x8x32xi1>
    %37 = arith.select %36, %32, %1 : vector<3x4x8x32xi1>, vector<3x4x8x32xf32>
    %c26_i32 = arith.constant 26 : i32
    %38 = tpu.dynamic_rotate %1 by %c26_i32 dim 3 : vector<3x4x8x32xf32>, i32 -> vector<3x4x8x32xf32>
    %c6_i32 = arith.constant 6 : i32
    %39 = tpu.dynamic_rotate %38 by %c6_i32 dim 2 : vector<3x4x8x32xf32>, i32 -> vector<3x4x8x32xf32>
    %c-6_i32 = arith.constant -6 : i32
    %40 = vector.broadcast %c-6_i32 : i32 to vector<4x8x32xi32>
    %41 = arith.cmpi eq, %30, %40 : vector<4x8x32xi32>
    %42 = vector.shape_cast %41 : vector<4x8x32xi1> to vector<1x4x8x32xi1>
    %43 = vector.broadcast %42 : vector<1x4x8x32xi1> to vector<3x4x8x32xi1>
    %44 = arith.select %43, %39, %37 : vector<3x4x8x32xi1>, vector<3x4x8x32xf32>
    %c27_i32 = arith.constant 27 : i32
    %45 = tpu.dynamic_rotate %1 by %c27_i32 dim 3 : vector<3x4x8x32xf32>, i32 -> vector<3x4x8x32xf32>
    %c5_i32 = arith.constant 5 : i32
    %46 = tpu.dynamic_rotate %45 by %c5_i32 dim 2 : vector<3x4x8x32xf32>, i32 -> vector<3x4x8x32xf32>
    %c-5_i32 = arith.constant -5 : i32
    %47 = vector.broadcast %c-5_i32 : i32 to vector<4x8x32xi32>
    %48 = arith.cmpi eq, %30, %47 : vector<4x8x32xi32>
    %49 = vector.shape_cast %48 : vector<4x8x32xi1> to vector<1x4x8x32xi1>
    %50 = vector.broadcast %49 : vector<1x4x8x32xi1> to vector<3x4x8x32xi1>
    %51 = arith.select %50, %46, %44 : vector<3x4x8x32xi1>, vector<3x4x8x32xf32>
    %c28_i32 = arith.constant 28 : i32
    %52 = tpu.dynamic_rotate %1 by %c28_i32 dim 3 : vector<3x4x8x32xf32>, i32 -> vector<3x4x8x32xf32>
    %c4_i32 = arith.constant 4 : i32
    %53 = tpu.dynamic_rotate %52 by %c4_i32 dim 2 : vector<3x4x8x32xf32>, i32 -> vector<3x4x8x32xf32>
    %c-4_i32 = arith.constant -4 : i32
    %54 = vector.broadcast %c-4_i32 : i32 to vector<4x8x32xi32>
    %55 = arith.cmpi eq, %30, %54 : vector<4x8x32xi32>
    %56 = vector.shape_cast %55 : vector<4x8x32xi1> to vector<1x4x8x32xi1>
    %57 = vector.broadcast %56 : vector<1x4x8x32xi1> to vector<3x4x8x32xi1>
    %58 = arith.select %57, %53, %51 : vector<3x4x8x32xi1>, vector<3x4x8x32xf32>
    %c29_i32 = arith.constant 29 : i32
    %59 = tpu.dynamic_rotate %1 by %c29_i32 dim 3 : vector<3x4x8x32xf32>, i32 -> vector<3x4x8x32xf32>
    %c3_i32 = arith.constant 3 : i32
    %60 = tpu.dynamic_rotate %59 by %c3_i32 dim 2 : vector<3x4x8x32xf32>, i32 -> vector<3x4x8x32xf32>
    %c-3_i32 = arith.constant -3 : i32
    %61 = vector.broadcast %c-3_i32 : i32 to vector<4x8x32xi32>
    %62 = arith.cmpi eq, %30, %61 : vector<4x8x32xi32>
    %63 = vector.shape_cast %62 : vector<4x8x32xi1> to vector<1x4x8x32xi1>
    %64 = vector.broadcast %63 : vector<1x4x8x32xi1> to vector<3x4x8x32xi1>
    %65 = arith.select %64, %60, %58 : vector<3x4x8x32xi1>, vector<3x4x8x32xf32>
    %c30_i32 = arith.constant 30 : i32
    %66 = tpu.dynamic_rotate %1 by %c30_i32 dim 3 : vector<3x4x8x32xf32>, i32 -> vector<3x4x8x32xf32>
    %c2_i32 = arith.constant 2 : i32
    %67 = tpu.dynamic_rotate %66 by %c2_i32 dim 2 : vector<3x4x8x32xf32>, i32 -> vector<3x4x8x32xf32>
    %c-2_i32 = arith.constant -2 : i32
    %68 = vector.broadcast %c-2_i32 : i32 to vector<4x8x32xi32>
    %69 = arith.cmpi eq, %30, %68 : vector<4x8x32xi32>
    %70 = vector.shape_cast %69 : vector<4x8x32xi1> to vector<1x4x8x32xi1>
    %71 = vector.broadcast %70 : vector<1x4x8x32xi1> to vector<3x4x8x32xi1>
    %72 = arith.select %71, %67, %65 : vector<3x4x8x32xi1>, vector<3x4x8x32xf32>
    %c31_i32 = arith.constant 31 : i32
    %73 = tpu.dynamic_rotate %1 by %c31_i32 dim 3 : vector<3x4x8x32xf32>, i32 -> vector<3x4x8x32xf32>
    %c1_i32_13 = arith.constant 1 : i32
    %74 = tpu.dynamic_rotate %73 by %c1_i32_13 dim 2 : vector<3x4x8x32xf32>, i32 -> vector<3x4x8x32xf32>
    %c-1_i32 = arith.constant -1 : i32
    %75 = vector.broadcast %c-1_i32 : i32 to vector<4x8x32xi32>
    %76 = arith.cmpi eq, %30, %75 : vector<4x8x32xi32>
    %77 = vector.shape_cast %76 : vector<4x8x32xi1> to vector<1x4x8x32xi1>
    %78 = vector.broadcast %77 : vector<1x4x8x32xi1> to vector<3x4x8x32xi1>
    %79 = arith.select %78, %74, %72 : vector<3x4x8x32xi1>, vector<3x4x8x32xf32>
    %c1_i32_14 = arith.constant 1 : i32
    %80 = tpu.dynamic_rotate %1 by %c1_i32_14 dim 3 : vector<3x4x8x32xf32>, i32 -> vector<3x4x8x32xf32>
    %c7_i32_15 = arith.constant 7 : i32
    %81 = tpu.dynamic_rotate %80 by %c7_i32_15 dim 2 : vector<3x4x8x32xf32>, i32 -> vector<3x4x8x32xf32>
    %c1_i32_16 = arith.constant 1 : i32
    %82 = vector.broadcast %c1_i32_16 : i32 to vector<4x8x32xi32>
    %83 = arith.cmpi eq, %30, %82 : vector<4x8x32xi32>
    %84 = vector.shape_cast %83 : vector<4x8x32xi1> to vector<1x4x8x32xi1>
    %85 = vector.broadcast %84 : vector<1x4x8x32xi1> to vector<3x4x8x32xi1>
    %86 = arith.select %85, %81, %79 : vector<3x4x8x32xi1>, vector<3x4x8x32xf32>
    %c2_i32_17 = arith.constant 2 : i32
    %87 = tpu.dynamic_rotate %1 by %c2_i32_17 dim 3 : vector<3x4x8x32xf32>, i32 -> vector<3x4x8x32xf32>
    %c6_i32_18 = arith.constant 6 : i32
    %88 = tpu.dynamic_rotate %87 by %c6_i32_18 dim 2 : vector<3x4x8x32xf32>, i32 -> vector<3x4x8x32xf32>
    %c2_i32_19 = arith.constant 2 : i32
    %89 = vector.broadcast %c2_i32_19 : i32 to vector<4x8x32xi32>
    %90 = arith.cmpi eq, %30, %89 : vector<4x8x32xi32>
    %91 = vector.shape_cast %90 : vector<4x8x32xi1> to vector<1x4x8x32xi1>
    %92 = vector.broadcast %91 : vector<1x4x8x32xi1> to vector<3x4x8x32xi1>
    %93 = arith.select %92, %88, %86 : vector<3x4x8x32xi1>, vector<3x4x8x32xf32>
    %c3_i32_20 = arith.constant 3 : i32
    %94 = tpu.dynamic_rotate %1 by %c3_i32_20 dim 3 : vector<3x4x8x32xf32>, i32 -> vector<3x4x8x32xf32>
    %c5_i32_21 = arith.constant 5 : i32
    %95 = tpu.dynamic_rotate %94 by %c5_i32_21 dim 2 : vector<3x4x8x32xf32>, i32 -> vector<3x4x8x32xf32>
    %c3_i32_22 = arith.constant 3 : i32
    %96 = vector.broadcast %c3_i32_22 : i32 to vector<4x8x32xi32>
    %97 = arith.cmpi eq, %30, %96 : vector<4x8x32xi32>
    %98 = vector.shape_cast %97 : vector<4x8x32xi1> to vector<1x4x8x32xi1>
    %99 = vector.broadcast %98 : vector<1x4x8x32xi1> to vector<3x4x8x32xi1>
    %100 = arith.select %99, %95, %93 : vector<3x4x8x32xi1>, vector<3x4x8x32xf32>
    %c4_i32_23 = arith.constant 4 : i32
    %101 = tpu.dynamic_rotate %1 by %c4_i32_23 dim 3 : vector<3x4x8x32xf32>, i32 -> vector<3x4x8x32xf32>
    %c4_i32_24 = arith.constant 4 : i32
    %102 = tpu.dynamic_rotate %101 by %c4_i32_24 dim 2 : vector<3x4x8x32xf32>, i32 -> vector<3x4x8x32xf32>
    %c4_i32_25 = arith.constant 4 : i32
    %103 = vector.broadcast %c4_i32_25 : i32 to vector<4x8x32xi32>
    %104 = arith.cmpi eq, %30, %103 : vector<4x8x32xi32>
    %105 = vector.shape_cast %104 : vector<4x8x32xi1> to vector<1x4x8x32xi1>
    %106 = vector.broadcast %105 : vector<1x4x8x32xi1> to vector<3x4x8x32xi1>
    %107 = arith.select %106, %102, %100 : vector<3x4x8x32xi1>, vector<3x4x8x32xf32>
    %c5_i32_26 = arith.constant 5 : i32
    %108 = tpu.dynamic_rotate %1 by %c5_i32_26 dim 3 : vector<3x4x8x32xf32>, i32 -> vector<3x4x8x32xf32>
    %c3_i32_27 = arith.constant 3 : i32
    %109 = tpu.dynamic_rotate %108 by %c3_i32_27 dim 2 : vector<3x4x8x32xf32>, i32 -> vector<3x4x8x32xf32>
    %c5_i32_28 = arith.constant 5 : i32
    %110 = vector.broadcast %c5_i32_28 : i32 to vector<4x8x32xi32>
    %111 = arith.cmpi eq, %30, %110 : vector<4x8x32xi32>
    %112 = vector.shape_cast %111 : vector<4x8x32xi1> to vector<1x4x8x32xi1>
    %113 = vector.broadcast %112 : vector<1x4x8x32xi1> to vector<3x4x8x32xi1>
    %114 = arith.select %113, %109, %107 : vector<3x4x8x32xi1>, vector<3x4x8x32xf32>
    %c6_i32_29 = arith.constant 6 : i32
    %115 = tpu.dynamic_rotate %1 by %c6_i32_29 dim 3 : vector<3x4x8x32xf32>, i32 -> vector<3x4x8x32xf32>
    %c2_i32_30 = arith.constant 2 : i32
    %116 = tpu.dynamic_rotate %115 by %c2_i32_30 dim 2 : vector<3x4x8x32xf32>, i32 -> vector<3x4x8x32xf32>
    %c6_i32_31 = arith.constant 6 : i32
    %117 = vector.broadcast %c6_i32_31 : i32 to vector<4x8x32xi32>
    %118 = arith.cmpi eq, %30, %117 : vector<4x8x32xi32>
    %119 = vector.shape_cast %118 : vector<4x8x32xi1> to vector<1x4x8x32xi1>
    %120 = vector.broadcast %119 : vector<1x4x8x32xi1> to vector<3x4x8x32xi1>
    %121 = arith.select %120, %116, %114 : vector<3x4x8x32xi1>, vector<3x4x8x32xf32>
    %c7_i32_32 = arith.constant 7 : i32
    %122 = tpu.dynamic_rotate %1 by %c7_i32_32 dim 3 : vector<3x4x8x32xf32>, i32 -> vector<3x4x8x32xf32>
    %c1_i32_33 = arith.constant 1 : i32
    %123 = tpu.dynamic_rotate %122 by %c1_i32_33 dim 2 : vector<3x4x8x32xf32>, i32 -> vector<3x4x8x32xf32>
    %c7_i32_34 = arith.constant 7 : i32
    %124 = vector.broadcast %c7_i32_34 : i32 to vector<4x8x32xi32>
    %125 = arith.cmpi eq, %30, %124 : vector<4x8x32xi32>
    %126 = vector.shape_cast %125 : vector<4x8x32xi1> to vector<1x4x8x32xi1>
    %127 = vector.broadcast %126 : vector<1x4x8x32xi1> to vector<3x4x8x32xi1>
    %128 = arith.select %127, %123, %121 : vector<3x4x8x32xi1>, vector<3x4x8x32xf32>
    %c0_35 = arith.constant 0 : index
    %c0_36 = arith.constant 0 : index
    %c0_37 = arith.constant 0 : index
    %c0_38 = arith.constant 0 : index
    %c0_39 = arith.constant 0 : index
    %129 = vector.load %arg4[%c0_35, %c0_36, %c0_37, %c0_38, %c0_39] : memref<1x3x4x8x32xf32, #tpu.memory_space<vmem>>, vector<1x3x4x8x32xf32>
    %130 = vector.shape_cast %129 : vector<1x3x4x8x32xf32> to vector<3x4x8x32xf32>
    %131 = vector.shape_cast %128 : vector<3x4x8x32xf32> to vector<1x3x4x8x32xf32>
    tpu.vector_store %arg4[%c0_35, %c0_36, %c0_37, %c0_38, %c0_39], %131 {strides = array<i32>} : memref<1x3x4x8x32xf32, #tpu.memory_space<vmem>>, vector<1x3x4x8x32xf32>,
    return
  }
  func.func @transform_0(%arg0: i32, %arg1: i32) -> (i32, i32, i32, i32, i32) {
    %c0_i32 = arith.constant 0 : i32
    %c0_i32_0 = arith.constant 0 : i32
    %c0_i32_1 = arith.constant 0 : i32
    %c0_i32_2 = arith.constant 0 : i32
    return %arg0, %c0_i32, %arg1, %c0_i32_0, %c0_i32_1 : i32, i32, i32, i32, i32
  }
  func.func @transform_1(%arg0: i32, %arg1: i32) -> (i32, i32, i32, i32) {
    %c0_i32 = arith.constant 0 : i32
    %c0_i32_0 = arith.constant 0 : i32
    %c0_i32_1 = arith.constant 0 : i32
    return %arg0, %arg1, %c0_i32, %c0_i32_0 : i32, i32, i32, i32
  }
  func.func @transform_2(%arg0: i32, %arg1: i32) -> (i32, i32, i32, i32, i32) {
    %c0_i32 = arith.constant 0 : i32
    %c0_i32_0 = arith.constant 0 : i32
    %c0_i32_1 = arith.constant 0 : i32
    %c0_i32_2 = arith.constant 0 : i32
    return %arg0, %c0_i32, %arg1, %c0_i32_0, %c0_i32_1 : i32, i32, i32, i32, i32
  }
}

</mosaic_0001>

<llo_original>
// kernel: tpu_custom_call.1
$region0: #{tpu_custom_call.1}
  #allocation0 [shape = 'u32[]', space=smem, size = 0x4, offset = 0x4, fixed_abs, tag = 'smem constant byte address 0x4 - core index']
  #allocation1 [shape = 'u32[72,128]{1,0:T(1,128)}', space=vmem, size = 0x9000, scoped, tag = 'internal scratch']
  %s0 = inlined_call_operand.hbm [shape: f32[2,3,4,8,32], index: 0, kind: input, shape index: {}]
  %s1 = inlined_call_operand.hbm [shape: s32[2,4,1,32], index: 1, kind: input, shape index: {}]
  %s2 = inlined_call_operand.hbm [shape: f32[2,3,4,8,32], index: 2, kind: output, shape index: {}]
  %s3 = sld [smem:[#allocation0]]
  $region49: #{tpu_custom_call.1} parent=0
    _
  %s5 = ssub.s32 1, %s3
  %s6 = scalar_select 0, %s5, %s3
  $region1: #{tpu_custom_call.1} parent=0
    #allocation2 [shape = 'u8[98304]{0}', space=vmem, size = 0x18000, scoped, tag = 'input window, operand 0']
    #allocation3 [shape = 's32[2]{0}', space=sflag, size = 0x8, scoped, tag = 'scoped memory for tpu_custom_call.1']
    #allocation4 [shape = 's32[2]{0}', space=sflag, size = 0x8, scoped, tag = 'scoped memory for tpu_custom_call.1']
    #allocation5 [shape = 'u8[4096]{0}', space=vmem, size = 0x1000, scoped, tag = 'input window, operand 1']
    #allocation6 [shape = 's32[2]{0}', space=sflag, size = 0x8, scoped, tag = 'scoped memory for tpu_custom_call.1']
    #allocation7 [shape = 'u8[98304]{0}', space=vmem, size = 0x18000, scoped, tag = 'output window, operand 0']
    %7 = vsyncpa [#allocation3], 0
    %s8 = scalar_lea.sflag [#allocation3], 1
    %9 = vsyncpa %s8, 0
    %10 = vsyncpa [#allocation6], 0
    %s11 = scalar_lea.sflag [#allocation6], 1
    %12 = vsyncpa %s11, 0
    %13 = vsyncpa [#allocation4], 0
    %s14 = scalar_lea.sflag [#allocation4], 1
    %15 = vsyncpa %s14, 0
    loop: start=0, step=1, limit=4
    $region2: #{tpu_custom_call.1} parent=1 // loop_pre_header
      _
    $region3: #{tpu_custom_call.1} parent=1 // loop_header
      %s17 = sphi 0, %s21
      %p18 = scmp.ge.s32.totalorder %s17, 4
      %s24 = sphi 0, %s36
      %s25 = sphi 0, %s32
      %s26 = sphi 0, %s24
      %s27 = sphi 0, %s25
      %s28 = sphi 0, %s26
      %s29 = sphi 0, %s27
      %s41 = sphi 0, %s43
      %s44 = sphi 0, %s41
      %s45 = sphi 0, %s44
      %s61 = sphi 0, %s45
      %s69 = sphi 0, %s71
      %s72 = sphi 0, %s69
      %s73 = sphi 0, %s72
      %s89 = sphi 0, %s73
      %s97 = sphi 0, %s99
      %s100 = sphi 0, %s97
      %s101 = sphi 0, %s100
      %s117 = sphi 0, %s101
    $region4: #{tpu_custom_call.1} parent=1 // loop_header_branch
      %20 = sbr.rel (%p18) target = $region8
    $region5: #{tpu_custom_call.1} parent=1 // loop_body
      %s22 = ssub.s32 %s17, 1
      %s23 = ssub.s32 %s17, 2
      %s30 = sadd.s32 1, %s25
      %p31 = scmp.ge.s32.totalorder %s30, 1
      %s32 = scalar_select %p31, 0, %s30
      %s33 = sadd.s32 1, %s24
      %s34 = scalar_select %p31, %s33, %s24
      %p35 = scmp.ge.s32.totalorder %s34, 2
      %s36 = scalar_select %p35, 0, %s34
      %s37 = ssub.s32 %s24, %s36
      %s38 = ssub.s32 %s25, %s32
      %s39 = sor.u32 %s37, %s38
      %p40 = scmp.eq.s32.totalorder %s39, 0
      %s42 = sadd.s32 %s41, 1
      %s43 = scalar_select %p40, %s41, %s42
      %p46 = pneg %p40
      %p47 = scmp.eq.s32.totalorder %s17, 1
      %p48 = por %p46, %p47
      %p49 = scmp.ne.s32.totalorder %s41, %s44
      %p50 = scmp.eq.s32.totalorder %s17, 0
      %p51 = por %p49, %p50
      %p52 = scmp.ne.s32.totalorder %s41, %s44
      %p53 = scmp.eq.s32.totalorder %s22, 1
      %p54 = por %p52, %p53
      %p55 = scmp.ne.s32.totalorder %s44, %s45
      %p56 = scmp.eq.s32.totalorder %s22, 0
      %p57 = por %p55, %p56
      %p58 = scmp.ne.s32.totalorder %s44, %s45
      %p59 = scmp.eq.s32.totalorder %s23, 1
      %p60 = por %p58, %p59
      %p62 = scmp.ne.s32.totalorder %s45, %s61
      %p63 = scmp.eq.s32.totalorder %s23, 0
      %p64 = por %p62, %p63
      %s65 = ssub.s32 %s24, %s36
      %s66 = ssub.s32 %s25, %s32
      %s67 = sor.u32 %s65, %s66
      %p68 = scmp.eq.s32.totalorder %s67, 0
      %s70 = sadd.s32 %s69, 1
      %s71 = scalar_select %p68, %s69, %s70
      %p74 = pneg %p68
      %p75 = scmp.eq.s32.totalorder %s17, 1
      %p76 = por %p74, %p75
      %p77 = scmp.ne.s32.totalorder %s69, %s72
      %p78 = scmp.eq.s32.totalorder %s17, 0
      %p79 = por %p77, %p78
      %p80 = scmp.ne.s32.totalorder %s69, %s72
      %p81 = scmp.eq.s32.totalorder %s22, 1
      %p82 = por %p80, %p81
      %p83 = scmp.ne.s32.totalorder %s72, %s73
      %p84 = scmp.eq.s32.totalorder %s22, 0
      %p85 = por %p83, %p84
      %p86 = scmp.ne.s32.totalorder %s72, %s73
      %p87 = scmp.eq.s32.totalorder %s23, 1
      %p88 = por %p86, %p87
      %p90 = scmp.ne.s32.totalorder %s73, %s89
      %p91 = scmp.eq.s32.totalorder %s23, 0
      %p92 = por %p90, %p91
      %s93 = ssub.s32 %s24, %s36
      %s94 = ssub.s32 %s25, %s32
      %s95 = sor.u32 %s93, %s94
      %p96 = scmp.eq.s32.totalorder %s95, 0
      %s98 = sadd.s32 %s97, 1
      %s99 = scalar_select %p96, %s97, %s98
      %p102 = pneg %p96
      %p103 = scmp.eq.s32.totalorder %s17, 1
      %p104 = por %p102, %p103
      %p105 = scmp.ne.s32.totalorder %s97, %s100
      %p106 = scmp.eq.s32.totalorder %s17, 0
      %p107 = por %p105, %p106
      %p108 = scmp.ne.s32.totalorder %s97, %s100
      %p109 = scmp.eq.s32.totalorder %s22, 1
      %p110 = por %p108, %p109
      %p111 = scmp.ne.s32.totalorder %s100, %s101
      %p112 = scmp.eq.s32.totalorder %s22, 0
      %p113 = por %p111, %p112
      %p114 = scmp.ne.s32.totalorder %s100, %s101
      %p115 = scmp.eq.s32.totalorder %s23, 1
      %p116 = por %p114, %p115
      %p118 = scmp.ne.s32.totalorder %s101, %s117
      %p119 = scmp.eq.s32.totalorder %s23, 0
      %p120 = por %p118, %p119
      %p121 = scmp.le.s32.totalorder 1, %s17
      %p122 = scmp.lt.s32.totalorder %s17, 3
      %p123 = pnand %p121, %p122
      %p124 = pneg %p123
      // Predicated region
      $region9: #{tpu_custom_call.1} parent=5 // pred_check
        _
      $region10: #{tpu_custom_call.1} parent=5 // pred_check_branch
        %126 = sbr.rel (%p123) target = $region12
      $region11: #{tpu_custom_call.1} parent=5 // pred_region
        %s127 = ssub.s32 %s17, 1
      $region12: #{tpu_custom_call.1} parent=5 // pred_fallthru
        _
      %p128 = scmp.lt.s32.totalorder %s17, 2
      // Predicated region
      $region13: #{tpu_custom_call.1} parent=5 // pred_check
        %p129 = pneg %p128
      $region14: #{tpu_custom_call.1} parent=5 // pred_check_branch
        %131 = sbr.rel (%p129) target = $region16
      $region15: #{tpu_custom_call.1} parent=5 // pred_region
        // Predicated region
        $region17: #{tpu_custom_call.1} parent=15 // pred_check
          %p132 = pneg %p51
        $region18: #{tpu_custom_call.1} parent=15 // pred_check_branch
          %134 = sbr.rel (%p132) target = $region20
        $region19: #{tpu_custom_call.1} parent=15 // pred_region
          %s135 = sand.u32 %s41, 1
          %s136 = scalar_lea.sflag [#allocation3], %s135
          %s137 = sand.u32 %s41, 1
          %s138 = smul.addr %s137, 96
          %s139 = scalar_lea.vmem [#allocation2], %s138
          %s140 = smul.u32 4, %s25
          %142 = vsyncadd %s136, 0
          %s143 = smul.addr %s24, 12
          %s144 = sadd.s32 %s140, %s143
          %s145 = smul.addr %s144, 8
          %s146 = scalar_lea.hbm %s0, %s145
          %s147 = sshll.u32 %s146, 4
          %s148 = int_to_ptr.hbm [resolvable:$true] %s147
          %s149 = sshll.u32 %s139, 4
          %s150 = int_to_ptr.vmem [resolvable:$true] %s149
          %155 = dma.hbm_to_vmem [thread:$0]  %s148, 1536, %s150, %s136, 128, 128, 8
        $region20: #{tpu_custom_call.1} parent=15 // pred_fallthru
          _
        // Predicated region
        $region21: #{tpu_custom_call.1} parent=15 // pred_check
          %p156 = pneg %p79
        $region22: #{tpu_custom_call.1} parent=15 // pred_check_branch
          %158 = sbr.rel (%p156) target = $region24
        $region23: #{tpu_custom_call.1} parent=15 // pred_region
          %s159 = sand.u32 %s69, 1
          %s160 = scalar_lea.sflag [#allocation6], %s159
          %s161 = sand.u32 %s69, 1
          %s162 = smul.addr %s161, 4
          %s163 = scalar_lea.vmem [#allocation5], %s162
          %s164 = smul.u32 4, %s25
          %166 = vsyncadd %s160, 0
          %s167 = smul.addr %s24, 4
          %s168 = sadd.s32 %s164, %s167
          %s169 = scalar_lea.hbm %s1, %s168
          %s170 = sshll.u32 %s169, 4
          %s171 = int_to_ptr.hbm [resolvable:$true] %s170
          %s172 = sshll.u32 %s163, 4
          %s173 = int_to_ptr.vmem [resolvable:$true] %s172
          %178 = dma.hbm_to_vmem [thread:$0]  %s171, 64, %s173, %s160, 16, 16, 1
        $region24: #{tpu_custom_call.1} parent=15 // pred_fallthru
          _
      $region16: #{tpu_custom_call.1} parent=5 // pred_fallthru
        _
      %p179 = scmp.le.s32.totalorder 1, %s17
      %p180 = scmp.lt.s32.totalorder %s17, 3
      %p181 = pnand %p179, %p180
      %p182 = pneg %p181
      // Predicated region
      $region25: #{tpu_custom_call.1} parent=5 // pred_check
        _
      $region26: #{tpu_custom_call.1} parent=5 // pred_check_branch
        %184 = sbr.rel (%p181) target = $region28
      $region27: #{tpu_custom_call.1} parent=5 // pred_region
        %s185 = ssub.s32 %s17, 1
        %s186 = sand.u32 %s44, 1
        %s187 = scalar_lea.sflag [#allocation3], %s186
        %s188 = sand.u32 %s44, 1
        %s189 = smul.addr %s188, 96
        %s190 = scalar_lea.vmem [#allocation2], %s189
        // Predicated region
        $region29: #{tpu_custom_call.1} parent=27 // pred_check
          %p191 = pneg %p57
        $region30: #{tpu_custom_call.1} parent=27 // pred_check_branch
          %193 = sbr.rel (%p191) target = $region32
        $region31: #{tpu_custom_call.1} parent=27 // pred_region
          %195 = dma.done %s187, 1536
        $region32: #{tpu_custom_call.1} parent=27 // pred_fallthru
          _
        %s196 = sand.u32 %s72, 1
        %s197 = scalar_lea.sflag [#allocation6], %s196
        %s198 = sand.u32 %s72, 1
        %s199 = smul.addr %s198, 4
        %s200 = scalar_lea.vmem [#allocation5], %s199
        // Predicated region
        $region33: #{tpu_custom_call.1} parent=27 // pred_check
          %p201 = pneg %p85
        $region34: #{tpu_custom_call.1} parent=27 // pred_check_branch
          %203 = sbr.rel (%p201) target = $region36
        $region35: #{tpu_custom_call.1} parent=27 // pred_region
          %205 = dma.done %s197, 64
        $region36: #{tpu_custom_call.1} parent=27 // pred_fallthru
          _
        %s206 = sand.u32 %s44, 1
        %s207 = scalar_lea.sflag [#allocation3], %s206
        %s208 = sand.u32 %s44, 1
        %s209 = smul.addr %s208, 96
        %s210 = scalar_lea.vmem [#allocation2], %s209
        %p211 = pneg %p57
        %p212 = pneg %p54
        %s213 = sand.u32 %s72, 1
        %s214 = scalar_lea.sflag [#allocation6], %s213
        %s215 = sand.u32 %s72, 1
        %s216 = smul.addr %s215, 4
        %s217 = scalar_lea.vmem [#allocation5], %s216
        %p218 = pneg %p85
        %p219 = pneg %p82
        %p220 = pneg %p113
        %p221 = pneg %p110
        %s222 = sand.u32 %s100, 1
        %s223 = scalar_lea.sflag [#allocation4], %s222
        %s224 = sand.u32 %s100, 1
        %s225 = smul.addr %s224, 96
        %s226 = scalar_lea.vmem [#allocation7], %s225
        %s227 = smul.u32 4, %s27
        %s228 = smul.u32 4, %s27
        %s229 = smul.u32 4, %s27
        %v230 = vld [vmem:[%s190] sm:$0xff]
        %v231 = vld [vmem:[%s190 + $0x8] sm:$0xff]
        %v232 = vld [vmem:[%s190 + $0x10] sm:$0xff]
        %v233 = vld [vmem:[%s190 + $0x18] sm:$0xff]
        %v234 = vld [vmem:[%s190 + $0x20] sm:$0xff]
        %v235 = vld [vmem:[%s190 + $0x28] sm:$0xff]
        %v236 = vld [vmem:[%s190 + $0x30] sm:$0xff]
        %v237 = vld [vmem:[%s190 + $0x38] sm:$0xff]
        %v238 = vld [vmem:[%s190 + $0x40] sm:$0xff]
        %v239 = vld [vmem:[%s190 + $0x48] sm:$0xff]
        %v240 = vld [vmem:[%s190 + $0x50] sm:$0xff]
        %v241 = vld [vmem:[%s190 + $0x58] sm:$0xff]
        %v242 = vld [vmem:[%s200] sm:$0x1]
        %v243 = vld [vmem:[%s200 + $0x1] sm:$0x1]
        %v244 = vld [vmem:[%s200 + $0x2] sm:$0x1]
        %v245 = vld [vmem:[%s200 + $0x3] sm:$0x1]
        %vm246 = vcmp.ne.s32.totalorder %v242, 0
        %vm247 = vcmp.ne.s32.totalorder %v243, 0
        %vm248 = vcmp.ne.s32.totalorder %v244, 0
        %vm249 = vcmp.ne.s32.totalorder %v245, 0
        %v250 = vlaneseq
        %v251 = vand.u32 %v250, 127
        %v252 = vlaneseq
        %v253 = vshrl.u32 %v252, 7
        %vm254 = vcmp.lt.s32.totalorder %v251, 0
        %v255 = vsub.s32 0, %v251
        %v256 = vsel %vm254, %v255, %v251
        %v257 = vshrl.u32 %v256, 3
        %v258 = vand.u32 %v256, 7
        %v259 = vsub.s32 0, %v258
        %v260 = vsel %vm254, %v259, %v258
        %vm261 = vcmp.ne.s32.totalorder %v260, 0
        %vm262 = vcmp.lt.s32.totalorder %v260, 0
        %vm263 = vmand %vm262, %vm261
        %v264 = vadd.s32 %v260, 8
        %v265 = vsel %vm263, %v264, %v260
        %v266 = vsub.s32 %v265, %v253
        %v267 = vsel %vm246, 1, 0
        %v268 = vsel %vm247, 1, 0
        %v269 = vsel %vm248, 1, 0
        %v270 = vsel %vm249, 1, 0
        %v271 = vperm.slane %v267, 0
        %v272 = vperm.slane %v268, 0
        %v273 = vperm.slane %v269, 0
        %v274 = vperm.slane %v270, 0
        %vm275 = vcmp.eq.s32.totalorder %v271, 1
        %vm276 = vcmp.eq.s32.totalorder %v272, 1
        %vm277 = vcmp.eq.s32.totalorder %v273, 1
        %vm278 = vcmp.eq.s32.totalorder %v274, 1
        %v279 = vsel %vm275, %v266, 8
        %v280 = vsel %vm276, %v266, 8
        %v281 = vsel %vm277, %v266, 8
        %v282 = vsel %vm278, %v266, 8
        %vm283 = vcmask 1047808
        %284 = vrot.lane.b32.xlu0 %v230, 32
        %v285 = vpop.permute.xlu0 %284
        %v286 = vsel %vm283, %v285, %v230
        %287 = vrot.lane.b32.xlu0 %v231, 32
        %v288 = vpop.permute.xlu0 %287
        %v289 = vsel %vm283, %v288, %v231
        %290 = vrot.lane.b32.xlu0 %v232, 32
        %v291 = vpop.permute.xlu0 %290
        %v292 = vsel %vm283, %v291, %v232
        %293 = vrot.lane.b32.xlu0 %v233, 32
        %v294 = vpop.permute.xlu0 %293
        %v295 = vsel %vm283, %v294, %v233
        %296 = vrot.lane.b32.xlu0 %v234, 32
        %v297 = vpop.permute.xlu0 %296
        %v298 = vsel %vm283, %v297, %v234
        %299 = vrot.lane.b32.xlu0 %v235, 32
        %v300 = vpop.permute.xlu0 %299
        %v301 = vsel %vm283, %v300, %v235
        %302 = vrot.lane.b32.xlu0 %v236, 32
        %v303 = vpop.permute.xlu0 %302
        %v304 = vsel %vm283, %v303, %v236
        %305 = vrot.lane.b32.xlu0 %v237, 32
        %v306 = vpop.permute.xlu0 %305
        %v307 = vsel %vm283, %v306, %v237
        %308 = vrot.lane.b32.xlu0 %v238, 32
        %v309 = vpop.permute.xlu0 %308
        %v310 = vsel %vm283, %v309, %v238
        %311 = vrot.lane.b32.xlu0 %v239, 32
        %v312 = vpop.permute.xlu0 %311
        %v313 = vsel %vm283, %v312, %v239
        %314 = vrot.lane.b32.xlu0 %v240, 32
        %v315 = vpop.permute.xlu0 %314
        %v316 = vsel %vm283, %v315, %v240
        %317 = vrot.lane.b32.xlu0 %v241, 32
        %v318 = vpop.permute.xlu0 %317
        %v319 = vsel %vm283, %v318, %v241
        %320 = vrot.lane.b32.xlu0 %v286, 32
        %v321 = vpop.permute.xlu0 %320
        %322 = vrot.lane.b32.xlu0 %v289, 32
        %v323 = vpop.permute.xlu0 %322
        %324 = vrot.lane.b32.xlu0 %v292, 32
        %v325 = vpop.permute.xlu0 %324
        %326 = vrot.lane.b32.xlu0 %v295, 32
        %v327 = vpop.permute.xlu0 %326
        %328 = vrot.lane.b32.xlu0 %v298, 32
        %v329 = vpop.permute.xlu0 %328
        %330 = vrot.lane.b32.xlu0 %v301, 32
        %v331 = vpop.permute.xlu0 %330
        %332 = vrot.lane.b32.xlu0 %v304, 32
        %v333 = vpop.permute.xlu0 %332
        %334 = vrot.lane.b32.xlu0 %v307, 32
        %v335 = vpop.permute.xlu0 %334
        %336 = vrot.lane.b32.xlu0 %v310, 32
        %v337 = vpop.permute.xlu0 %336
        %338 = vrot.lane.b32.xlu0 %v313, 32
        %v339 = vpop.permute.xlu0 %338
        %340 = vrot.lane.b32.xlu0 %v316, 32
        %v341 = vpop.permute.xlu0 %340
        %342 = vrot.lane.b32.xlu0 %v319, 32
        %v343 = vpop.permute.xlu0 %342
        %v344 = vsel %vm283, %v321, %v230
        %v345 = vsel %vm283, %v323, %v231
        %v346 = vsel %vm283, %v325, %v232
        %v347 = vsel %vm283, %v327, %v233
        %v348 = vsel %vm283, %v329, %v234
        %v349 = vsel %vm283, %v331, %v235
        %v350 = vsel %vm283, %v333, %v236
        %v351 = vsel %vm283, %v335, %v237
        %v352 = vsel %vm283, %v337, %v238
        %v353 = vsel %vm283, %v339, %v239
        %v354 = vsel %vm283, %v341, %v240
        %v355 = vsel %vm283, %v343, %v241
        %368 = vrot.lane.b32.xlu0 %v344, 121
        %v369 = vpop.permute.xlu0 %368
        %370 = vrot.lane.b32.xlu0 %v345, 121
        %v371 = vpop.permute.xlu0 %370
        %372 = vrot.lane.b32.xlu0 %v346, 121
        %v373 = vpop.permute.xlu0 %372
        %374 = vrot.lane.b32.xlu0 %v347, 121
        %v375 = vpop.permute.xlu0 %374
        %376 = vrot.lane.b32.xlu0 %v348, 121
        %v377 = vpop.permute.xlu0 %376
        %378 = vrot.lane.b32.xlu0 %v349, 121
        %v379 = vpop.permute.xlu0 %378
        %380 = vrot.lane.b32.xlu0 %v350, 121
        %v381 = vpop.permute.xlu0 %380
        %382 = vrot.lane.b32.xlu0 %v351, 121
        %v383 = vpop.permute.xlu0 %382
        %384 = vrot.lane.b32.xlu0 %v352, 121
        %v385 = vpop.permute.xlu0 %384
        %386 = vrot.lane.b32.xlu0 %v353, 121
        %v387 = vpop.permute.xlu0 %386
        %388 = vrot.lane.b32.xlu0 %v354, 121
        %v389 = vpop.permute.xlu0 %388
        %390 = vrot.lane.b32.xlu0 %v355, 121
        %v391 = vpop.permute.xlu0 %390
        %v404 = vrot.slane %v369, 1
        %v405 = vrot.slane %v371, 1
        %v406 = vrot.slane %v373, 1
        %v407 = vrot.slane %v375, 1
        %v408 = vrot.slane %v377, 1
        %v409 = vrot.slane %v379, 1
        %v410 = vrot.slane %v381, 1
        %v411 = vrot.slane %v383, 1
        %v412 = vrot.slane %v385, 1
        %v413 = vrot.slane %v387, 1
        %v414 = vrot.slane %v389, 1
        %v415 = vrot.slane %v391, 1
        %vm416 = vcmp.eq.s32.totalorder %v279, 4294967289
        %vm417 = vcmp.eq.s32.totalorder %v280, 4294967289
        %vm418 = vcmp.eq.s32.totalorder %v281, 4294967289
        %vm419 = vcmp.eq.s32.totalorder %v282, 4294967289
        %v420 = vsel %vm416, 1, 0
        %v421 = vsel %vm417, 1, 0
        %v422 = vsel %vm418, 1, 0
        %v423 = vsel %vm419, 1, 0
        %vm424 = vcmp.eq.s32.totalorder %v420, 1
        %vm425 = vcmp.eq.s32.totalorder %v421, 1
        %vm426 = vcmp.eq.s32.totalorder %v422, 1
        %vm427 = vcmp.eq.s32.totalorder %v423, 1
        %v428 = vsel %vm424, %v404, %v230
        %v429 = vsel %vm425, %v405, %v231
        %v430 = vsel %vm426, %v406, %v232
        %v431 = vsel %vm427, %v407, %v233
        %v432 = vsel %vm424, %v408, %v234
        %v433 = vsel %vm425, %v409, %v235
        %v434 = vsel %vm426, %v410, %v236
        %v435 = vsel %vm427, %v411, %v237
        %v436 = vsel %vm424, %v412, %v238
        %v437 = vsel %vm425, %v413, %v239
        %v438 = vsel %vm426, %v414, %v240
        %v439 = vsel %vm427, %v415, %v241
        %440 = vrot.lane.b32.xlu0 %v344, 122
        %v441 = vpop.permute.xlu0 %440
        %442 = vrot.lane.b32.xlu0 %v345, 122
        %v443 = vpop.permute.xlu0 %442
        %444 = vrot.lane.b32.xlu0 %v346, 122
        %v445 = vpop.permute.xlu0 %444
        %446 = vrot.lane.b32.xlu0 %v347, 122
        %v447 = vpop.permute.xlu0 %446
        %448 = vrot.lane.b32.xlu0 %v348, 122
        %v449 = vpop.permute.xlu0 %448
        %450 = vrot.lane.b32.xlu0 %v349, 122
        %v451 = vpop.permute.xlu0 %450
        %452 = vrot.lane.b32.xlu0 %v350, 122
        %v453 = vpop.permute.xlu0 %452
        %454 = vrot.lane.b32.xlu0 %v351, 122
        %v455 = vpop.permute.xlu0 %454
        %456 = vrot.lane.b32.xlu0 %v352, 122
        %v457 = vpop.permute.xlu0 %456
        %458 = vrot.lane.b32.xlu0 %v353, 122
        %v459 = vpop.permute.xlu0 %458
        %460 = vrot.lane.b32.xlu0 %v354, 122
        %v461 = vpop.permute.xlu0 %460
        %462 = vrot.lane.b32.xlu0 %v355, 122
        %v463 = vpop.permute.xlu0 %462
        %v476 = vrot.slane %v441, 2
        %v477 = vrot.slane %v443, 2
        %v478 = vrot.slane %v445, 2
        %v479 = vrot.slane %v447, 2
        %v480 = vrot.slane %v449, 2
        %v481 = vrot.slane %v451, 2
        %v482 = vrot.slane %v453, 2
        %v483 = vrot.slane %v455, 2
        %v484 = vrot.slane %v457, 2
        %v485 = vrot.slane %v459, 2
        %v486 = vrot.slane %v461, 2
        %v487 = vrot.slane %v463, 2
        %vm488 = vcmp.eq.s32.totalorder %v279, 4294967290
        %vm489 = vcmp.eq.s32.totalorder %v280, 4294967290
        %vm490 = vcmp.eq.s32.totalorder %v281, 4294967290
        %vm491 = vcmp.eq.s32.totalorder %v282, 4294967290
        %v492 = vsel %vm488, 1, 0
        %v493 = vsel %vm489, 1, 0
        %v494 = vsel %vm490, 1, 0
        %v495 = vsel %vm491, 1, 0
        %vm496 = vcmp.eq.s32.totalorder %v492, 1
        %vm497 = vcmp.eq.s32.totalorder %v493, 1
        %vm498 = vcmp.eq.s32.totalorder %v494, 1
        %vm499 = vcmp.eq.s32.totalorder %v495, 1
        %v500 = vsel %vm496, %v476, %v428
        %v501 = vsel %vm497, %v477, %v429
        %v502 = vsel %vm498, %v478, %v430
        %v503 = vsel %vm499, %v479, %v431
        %v504 = vsel %vm496, %v480, %v432
        %v505 = vsel %vm497, %v481, %v433
        %v506 = vsel %vm498, %v482, %v434
        %v507 = vsel %vm499, %v483, %v435
        %v508 = vsel %vm496, %v484, %v436
        %v509 = vsel %vm497, %v485, %v437
        %v510 = vsel %vm498, %v486, %v438
        %v511 = vsel %vm499, %v487, %v439
        %512 = vrot.lane.b32.xlu0 %v344, 123
        %v513 = vpop.permute.xlu0 %512
        %514 = vrot.lane.b32.xlu0 %v345, 123
        %v515 = vpop.permute.xlu0 %514
        %516 = vrot.lane.b32.xlu0 %v346, 123
        %v517 = vpop.permute.xlu0 %516
        %518 = vrot.lane.b32.xlu0 %v347, 123
        %v519 = vpop.permute.xlu0 %518
        %520 = vrot.lane.b32.xlu0 %v348, 123
        %v521 = vpop.permute.xlu0 %520
        %522 = vrot.lane.b32.xlu0 %v349, 123
        %v523 = vpop.permute.xlu0 %522
        %524 = vrot.lane.b32.xlu0 %v350, 123
        %v525 = vpop.permute.xlu0 %524
        %526 = vrot.lane.b32.xlu0 %v351, 123
        %v527 = vpop.permute.xlu0 %526
        %528 = vrot.lane.b32.xlu0 %v352, 123
        %v529 = vpop.permute.xlu0 %528
        %530 = vrot.lane.b32.xlu0 %v353, 123
        %v531 = vpop.permute.xlu0 %530
        %532 = vrot.lane.b32.xlu0 %v354, 123
        %v533 = vpop.permute.xlu0 %532
        %534 = vrot.lane.b32.xlu0 %v355, 123
        %v535 = vpop.permute.xlu0 %534
        %v548 = vrot.slane %v513, 3
        %v549 = vrot.slane %v515, 3
        %v550 = vrot.slane %v517, 3
        %v551 = vrot.slane %v519, 3
        %v552 = vrot.slane %v521, 3
        %v553 = vrot.slane %v523, 3
        %v554 = vrot.slane %v525, 3
        %v555 = vrot.slane %v527, 3
        %v556 = vrot.slane %v529, 3
        %v557 = vrot.slane %v531, 3
        %v558 = vrot.slane %v533, 3
        %v559 = vrot.slane %v535, 3
        %vm560 = vcmp.eq.s32.totalorder %v279, 4294967291
        %vm561 = vcmp.eq.s32.totalorder %v280, 4294967291
        %vm562 = vcmp.eq.s32.totalorder %v281, 4294967291
        %vm563 = vcmp.eq.s32.totalorder %v282, 4294967291
        %v564 = vsel %vm560, 1, 0
        %v565 = vsel %vm561, 1, 0
        %v566 = vsel %vm562, 1, 0
        %v567 = vsel %vm563, 1, 0
        %vm568 = vcmp.eq.s32.totalorder %v564, 1
        %vm569 = vcmp.eq.s32.totalorder %v565, 1
        %vm570 = vcmp.eq.s32.totalorder %v566, 1
        %vm571 = vcmp.eq.s32.totalorder %v567, 1
        %v572 = vsel %vm568, %v548, %v500
        %v573 = vsel %vm569, %v549, %v501
        %v574 = vsel %vm570, %v550, %v502
        %v575 = vsel %vm571, %v551, %v503
        %v576 = vsel %vm568, %v552, %v504
        %v577 = vsel %vm569, %v553, %v505
        %v578 = vsel %vm570, %v554, %v506
        %v579 = vsel %vm571, %v555, %v507
        %v580 = vsel %vm568, %v556, %v508
        %v581 = vsel %vm569, %v557, %v509
        %v582 = vsel %vm570, %v558, %v510
        %v583 = vsel %vm571, %v559, %v511
        %584 = vrot.lane.b32.xlu0 %v344, 124
        %v585 = vpop.permute.xlu0 %584
        %586 = vrot.lane.b32.xlu0 %v345, 124
        %v587 = vpop.permute.xlu0 %586
        %588 = vrot.lane.b32.xlu0 %v346, 124
        %v589 = vpop.permute.xlu0 %588
        %590 = vrot.lane.b32.xlu0 %v347, 124
        %v591 = vpop.permute.xlu0 %590
        %592 = vrot.lane.b32.xlu0 %v348, 124
        %v593 = vpop.permute.xlu0 %592
        %594 = vrot.lane.b32.xlu0 %v349, 124
        %v595 = vpop.permute.xlu0 %594
        %596 = vrot.lane.b32.xlu0 %v350, 124
        %v597 = vpop.permute.xlu0 %596
        %598 = vrot.lane.b32.xlu0 %v351, 124
        %v599 = vpop.permute.xlu0 %598
        %600 = vrot.lane.b32.xlu0 %v352, 124
        %v601 = vpop.permute.xlu0 %600
        %602 = vrot.lane.b32.xlu0 %v353, 124
        %v603 = vpop.permute.xlu0 %602
        %604 = vrot.lane.b32.xlu0 %v354, 124
        %v605 = vpop.permute.xlu0 %604
        %606 = vrot.lane.b32.xlu0 %v355, 124
        %v607 = vpop.permute.xlu0 %606
        %v620 = vrot.slane %v585, 4
        %v621 = vrot.slane %v587, 4
        %v622 = vrot.slane %v589, 4
        %v623 = vrot.slane %v591, 4
        %v624 = vrot.slane %v593, 4
        %v625 = vrot.slane %v595, 4
        %v626 = vrot.slane %v597, 4
        %v627 = vrot.slane %v599, 4
        %v628 = vrot.slane %v601, 4
        %v629 = vrot.slane %v603, 4
        %v630 = vrot.slane %v605, 4
        %v631 = vrot.slane %v607, 4
        %vm632 = vcmp.eq.s32.totalorder %v279, 4294967292
        %vm633 = vcmp.eq.s32.totalorder %v280, 4294967292
        %vm634 = vcmp.eq.s32.totalorder %v281, 4294967292
        %vm635 = vcmp.eq.s32.totalorder %v282, 4294967292
        %v636 = vsel %vm632, 1, 0
        %v637 = vsel %vm633, 1, 0
        %v638 = vsel %vm634, 1, 0
        %v639 = vsel %vm635, 1, 0
        %vm640 = vcmp.eq.s32.totalorder %v636, 1
        %vm641 = vcmp.eq.s32.totalorder %v637, 1
        %vm642 = vcmp.eq.s32.totalorder %v638, 1
        %vm643 = vcmp.eq.s32.totalorder %v639, 1
        %v644 = vsel %vm640, %v620, %v572
        %v645 = vsel %vm641, %v621, %v573
        %v646 = vsel %vm642, %v622, %v574
        %v647 = vsel %vm643, %v623, %v575
        %v648 = vsel %vm640, %v624, %v576
        %v649 = vsel %vm641, %v625, %v577
        %v650 = vsel %vm642, %v626, %v578
        %v651 = vsel %vm643, %v627, %v579
        %v652 = vsel %vm640, %v628, %v580
        %v653 = vsel %vm641, %v629, %v581
        %v654 = vsel %vm642, %v630, %v582
        %v655 = vsel %vm643, %v631, %v583
        %656 = vrot.lane.b32.xlu0 %v344, 125
        %v657 = vpop.permute.xlu0 %656
        %658 = vrot.lane.b32.xlu0 %v345, 125
        %v659 = vpop.permute.xlu0 %658
        %660 = vrot.lane.b32.xlu0 %v346, 125
        %v661 = vpop.permute.xlu0 %660
        %662 = vrot.lane.b32.xlu0 %v347, 125
        %v663 = vpop.permute.xlu0 %662
        %664 = vrot.lane.b32.xlu0 %v348, 125
        %v665 = vpop.permute.xlu0 %664
        %666 = vrot.lane.b32.xlu0 %v349, 125
        %v667 = vpop.permute.xlu0 %666
        %668 = vrot.lane.b32.xlu0 %v350, 125
        %v669 = vpop.permute.xlu0 %668
        %670 = vrot.lane.b32.xlu0 %v351, 125
        %v671 = vpop.permute.xlu0 %670
        %672 = vrot.lane.b32.xlu0 %v352, 125
        %v673 = vpop.permute.xlu0 %672
        %674 = vrot.lane.b32.xlu0 %v353, 125
        %v675 = vpop.permute.xlu0 %674
        %676 = vrot.lane.b32.xlu0 %v354, 125
        %v677 = vpop.permute.xlu0 %676
        %678 = vrot.lane.b32.xlu0 %v355, 125
        %v679 = vpop.permute.xlu0 %678
        %v692 = vrot.slane %v657, 5
        %v693 = vrot.slane %v659, 5
        %v694 = vrot.slane %v661, 5
        %v695 = vrot.slane %v663, 5
        %v696 = vrot.slane %v665, 5
        %v697 = vrot.slane %v667, 5
        %v698 = vrot.slane %v669, 5
        %v699 = vrot.slane %v671, 5
        %v700 = vrot.slane %v673, 5
        %v701 = vrot.slane %v675, 5
        %v702 = vrot.slane %v677, 5
        %v703 = vrot.slane %v679, 5
        %vm704 = vcmp.eq.s32.totalorder %v279, 4294967293
        %vm705 = vcmp.eq.s32.totalorder %v280, 4294967293
        %vm706 = vcmp.eq.s32.totalorder %v281, 4294967293
        %vm707 = vcmp.eq.s32.totalorder %v282, 4294967293
        %v708 = vsel %vm704, 1, 0
        %v709 = vsel %vm705, 1, 0
        %v710 = vsel %vm706, 1, 0
        %v711 = vsel %vm707, 1, 0
        %vm712 = vcmp.eq.s32.totalorder %v708, 1
        %vm713 = vcmp.eq.s32.totalorder %v709, 1
        %vm714 = vcmp.eq.s32.totalorder %v710, 1
        %vm715 = vcmp.eq.s32.totalorder %v711, 1
        %v716 = vsel %vm712, %v692, %v644
        %v717 = vsel %vm713, %v693, %v645
        %v718 = vsel %vm714, %v694, %v646
        %v719 = vsel %vm715, %v695, %v647
        %v720 = vsel %vm712, %v696, %v648
        %v721 = vsel %vm713, %v697, %v649
        %v722 = vsel %vm714, %v698, %v650
        %v723 = vsel %vm715, %v699, %v651
        %v724 = vsel %vm712, %v700, %v652
        %v725 = vsel %vm713, %v701, %v653
        %v726 = vsel %vm714, %v702, %v654
        %v727 = vsel %vm715, %v703, %v655
        %728 = vrot.lane.b32.xlu0 %v344, 126
        %v729 = vpop.permute.xlu0 %728
        %730 = vrot.lane.b32.xlu0 %v345, 126
        %v731 = vpop.permute.xlu0 %730
        %732 = vrot.lane.b32.xlu0 %v346, 126
        %v733 = vpop.permute.xlu0 %732
        %734 = vrot.lane.b32.xlu0 %v347, 126
        %v735 = vpop.permute.xlu0 %734
        %736 = vrot.lane.b32.xlu0 %v348, 126
        %v737 = vpop.permute.xlu0 %736
        %738 = vrot.lane.b32.xlu0 %v349, 126
        %v739 = vpop.permute.xlu0 %738
        %740 = vrot.lane.b32.xlu0 %v350, 126
        %v741 = vpop.permute.xlu0 %740
        %742 = vrot.lane.b32.xlu0 %v351, 126
        %v743 = vpop.permute.xlu0 %742
        %744 = vrot.lane.b32.xlu0 %v352, 126
        %v745 = vpop.permute.xlu0 %744
        %746 = vrot.lane.b32.xlu0 %v353, 126
        %v747 = vpop.permute.xlu0 %746
        %748 = vrot.lane.b32.xlu0 %v354, 126
        %v749 = vpop.permute.xlu0 %748
        %750 = vrot.lane.b32.xlu0 %v355, 126
        %v751 = vpop.permute.xlu0 %750
        %v764 = vrot.slane %v729, 6
        %v765 = vrot.slane %v731, 6
        %v766 = vrot.slane %v733, 6
        %v767 = vrot.slane %v735, 6
        %v768 = vrot.slane %v737, 6
        %v769 = vrot.slane %v739, 6
        %v770 = vrot.slane %v741, 6
        %v771 = vrot.slane %v743, 6
        %v772 = vrot.slane %v745, 6
        %v773 = vrot.slane %v747, 6
        %v774 = vrot.slane %v749, 6
        %v775 = vrot.slane %v751, 6
        %vm776 = vcmp.eq.s32.totalorder %v279, 4294967294
        %vm777 = vcmp.eq.s32.totalorder %v280, 4294967294
        %vm778 = vcmp.eq.s32.totalorder %v281, 4294967294
        %vm779 = vcmp.eq.s32.totalorder %v282, 4294967294
        %v780 = vsel %vm776, 1, 0
        %v781 = vsel %vm777, 1, 0
        %v782 = vsel %vm778, 1, 0
        %v783 = vsel %vm779, 1, 0
        %vm784 = vcmp.eq.s32.totalorder %v780, 1
        %vm785 = vcmp.eq.s32.totalorder %v781, 1
        %vm786 = vcmp.eq.s32.totalorder %v782, 1
        %vm787 = vcmp.eq.s32.totalorder %v783, 1
        %v788 = vsel %vm784, %v764, %v716
        %v789 = vsel %vm785, %v765, %v717
        %v790 = vsel %vm786, %v766, %v718
        %v791 = vsel %vm787, %v767, %v719
        %v792 = vsel %vm784, %v768, %v720
        %v793 = vsel %vm785, %v769, %v721
        %v794 = vsel %vm786, %v770, %v722
        %v795 = vsel %vm787, %v771, %v723
        %v796 = vsel %vm784, %v772, %v724
        %v797 = vsel %vm785, %v773, %v725
        %v798 = vsel %vm786, %v774, %v726
        %v799 = vsel %vm787, %v775, %v727
        %800 = vrot.lane.b32.xlu0 %v344, 127
        %v801 = vpop.permute.xlu0 %800
        %802 = vrot.lane.b32.xlu0 %v345, 127
        %v803 = vpop.permute.xlu0 %802
        %804 = vrot.lane.b32.xlu0 %v346, 127
        %v805 = vpop.permute.xlu0 %804
        %806 = vrot.lane.b32.xlu0 %v347, 127
        %v807 = vpop.permute.xlu0 %806
        %808 = vrot.lane.b32.xlu0 %v348, 127
        %v809 = vpop.permute.xlu0 %808
        %810 = vrot.lane.b32.xlu0 %v349, 127
        %v811 = vpop.permute.xlu0 %810
        %812 = vrot.lane.b32.xlu0 %v350, 127
        %v813 = vpop.permute.xlu0 %812
        %814 = vrot.lane.b32.xlu0 %v351, 127
        %v815 = vpop.permute.xlu0 %814
        %816 = vrot.lane.b32.xlu0 %v352, 127
        %v817 = vpop.permute.xlu0 %816
        %818 = vrot.lane.b32.xlu0 %v353, 127
        %v819 = vpop.permute.xlu0 %818
        %820 = vrot.lane.b32.xlu0 %v354, 127
        %v821 = vpop.permute.xlu0 %820
        %822 = vrot.lane.b32.xlu0 %v355, 127
        %v823 = vpop.permute.xlu0 %822
        %v836 = vrot.slane %v801, 7
        %v837 = vrot.slane %v803, 7
        %v838 = vrot.slane %v805, 7
        %v839 = vrot.slane %v807, 7
        %v840 = vrot.slane %v809, 7
        %v841 = vrot.slane %v811, 7
        %v842 = vrot.slane %v813, 7
        %v843 = vrot.slane %v815, 7
        %v844 = vrot.slane %v817, 7
        %v845 = vrot.slane %v819, 7
        %v846 = vrot.slane %v821, 7
        %v847 = vrot.slane %v823, 7
        %vm848 = vcmp.eq.s32.totalorder %v279, 4294967295
        %vm849 = vcmp.eq.s32.totalorder %v280, 4294967295
        %vm850 = vcmp.eq.s32.totalorder %v281, 4294967295
        %vm851 = vcmp.eq.s32.totalorder %v282, 4294967295
        %v852 = vsel %vm848, 1, 0
        %v853 = vsel %vm849, 1, 0
        %v854 = vsel %vm850, 1, 0
        %v855 = vsel %vm851, 1, 0
        %vm856 = vcmp.eq.s32.totalorder %v852, 1
        %vm857 = vcmp.eq.s32.totalorder %v853, 1
        %vm858 = vcmp.eq.s32.totalorder %v854, 1
        %vm859 = vcmp.eq.s32.totalorder %v855, 1
        %v860 = vsel %vm856, %v836, %v788
        %v861 = vsel %vm857, %v837, %v789
        %v862 = vsel %vm858, %v838, %v790
        %v863 = vsel %vm859, %v839, %v791
        %v864 = vsel %vm856, %v840, %v792
        %v865 = vsel %vm857, %v841, %v793
        %v866 = vsel %vm858, %v842, %v794
        %v867 = vsel %vm859, %v843, %v795
        %v868 = vsel %vm856, %v844, %v796
        %v869 = vsel %vm857, %v845, %v797
        %v870 = vsel %vm858, %v846, %v798
        %v871 = vsel %vm859, %v847, %v799
        %872 = vrot.lane.b32.xlu0 %v344, 97
        %v873 = vpop.permute.xlu0 %872
        %874 = vrot.lane.b32.xlu0 %v345, 97
        %v875 = vpop.permute.xlu0 %874
        %876 = vrot.lane.b32.xlu0 %v346, 97
        %v877 = vpop.permute.xlu0 %876
        %878 = vrot.lane.b32.xlu0 %v347, 97
        %v879 = vpop.permute.xlu0 %878
        %880 = vrot.lane.b32.xlu0 %v348, 97
        %v881 = vpop.permute.xlu0 %880
        %882 = vrot.lane.b32.xlu0 %v349, 97
        %v883 = vpop.permute.xlu0 %882
        %884 = vrot.lane.b32.xlu0 %v350, 97
        %v885 = vpop.permute.xlu0 %884
        %886 = vrot.lane.b32.xlu0 %v351, 97
        %v887 = vpop.permute.xlu0 %886
        %888 = vrot.lane.b32.xlu0 %v352, 97
        %v889 = vpop.permute.xlu0 %888
        %890 = vrot.lane.b32.xlu0 %v353, 97
        %v891 = vpop.permute.xlu0 %890
        %892 = vrot.lane.b32.xlu0 %v354, 97
        %v893 = vpop.permute.xlu0 %892
        %894 = vrot.lane.b32.xlu0 %v355, 97
        %v895 = vpop.permute.xlu0 %894
        %v908 = vrot.slane %v873, 1
        %v909 = vrot.slane %v875, 1
        %v910 = vrot.slane %v877, 1
        %v911 = vrot.slane %v879, 1
        %v912 = vrot.slane %v881, 1
        %v913 = vrot.slane %v883, 1
        %v914 = vrot.slane %v885, 1
        %v915 = vrot.slane %v887, 1
        %v916 = vrot.slane %v889, 1
        %v917 = vrot.slane %v891, 1
        %v918 = vrot.slane %v893, 1
        %v919 = vrot.slane %v895, 1
        %vm920 = vcmp.eq.s32.totalorder %v279, 1
        %vm921 = vcmp.eq.s32.totalorder %v280, 1
        %vm922 = vcmp.eq.s32.totalorder %v281, 1
        %vm923 = vcmp.eq.s32.totalorder %v282, 1
        %v924 = vsel %vm920, 1, 0
        %v925 = vsel %vm921, 1, 0
        %v926 = vsel %vm922, 1, 0
        %v927 = vsel %vm923, 1, 0
        %vm928 = vcmp.eq.s32.totalorder %v924, 1
        %vm929 = vcmp.eq.s32.totalorder %v925, 1
        %vm930 = vcmp.eq.s32.totalorder %v926, 1
        %vm931 = vcmp.eq.s32.totalorder %v927, 1
        %v932 = vsel %vm928, %v908, %v860
        %v933 = vsel %vm929, %v909, %v861
        %v934 = vsel %vm930, %v910, %v862
        %v935 = vsel %vm931, %v911, %v863
        %v936 = vsel %vm928, %v912, %v864
        %v937 = vsel %vm929, %v913, %v865
        %v938 = vsel %vm930, %v914, %v866
        %v939 = vsel %vm931, %v915, %v867
        %v940 = vsel %vm928, %v916, %v868
        %v941 = vsel %vm929, %v917, %v869
        %v942 = vsel %vm930, %v918, %v870
        %v943 = vsel %vm931, %v919, %v871
        %944 = vrot.lane.b32.xlu0 %v344, 98
        %v945 = vpop.permute.xlu0 %944
        %946 = vrot.lane.b32.xlu0 %v345, 98
        %v947 = vpop.permute.xlu0 %946
        %948 = vrot.lane.b32.xlu0 %v346, 98
        %v949 = vpop.permute.xlu0 %948
        %950 = vrot.lane.b32.xlu0 %v347, 98
        %v951 = vpop.permute.xlu0 %950
        %952 = vrot.lane.b32.xlu0 %v348, 98
        %v953 = vpop.permute.xlu0 %952
        %954 = vrot.lane.b32.xlu0 %v349, 98
        %v955 = vpop.permute.xlu0 %954
        %956 = vrot.lane.b32.xlu0 %v350, 98
        %v957 = vpop.permute.xlu0 %956
        %958 = vrot.lane.b32.xlu0 %v351, 98
        %v959 = vpop.permute.xlu0 %958
        %960 = vrot.lane.b32.xlu0 %v352, 98
        %v961 = vpop.permute.xlu0 %960
        %962 = vrot.lane.b32.xlu0 %v353, 98
        %v963 = vpop.permute.xlu0 %962
        %964 = vrot.lane.b32.xlu0 %v354, 98
        %v965 = vpop.permute.xlu0 %964
        %966 = vrot.lane.b32.xlu0 %v355, 98
        %v967 = vpop.permute.xlu0 %966
        %v980 = vrot.slane %v945, 2
        %v981 = vrot.slane %v947, 2
        %v982 = vrot.slane %v949, 2
        %v983 = vrot.slane %v951, 2
        %v984 = vrot.slane %v953, 2
        %v985 = vrot.slane %v955, 2
        %v986 = vrot.slane %v957, 2
        %v987 = vrot.slane %v959, 2
        %v988 = vrot.slane %v961, 2
        %v989 = vrot.slane %v963, 2
        %v990 = vrot.slane %v965, 2
        %v991 = vrot.slane %v967, 2
        %vm992 = vcmp.eq.s32.totalorder %v279, 2
        %vm993 = vcmp.eq.s32.totalorder %v280, 2
        %vm994 = vcmp.eq.s32.totalorder %v281, 2
        %vm995 = vcmp.eq.s32.totalorder %v282, 2
        %v996 = vsel %vm992, 1, 0
        %v997 = vsel %vm993, 1, 0
        %v998 = vsel %vm994, 1, 0
        %v999 = vsel %vm995, 1, 0
        %vm1000 = vcmp.eq.s32.totalorder %v996, 1
        %vm1001 = vcmp.eq.s32.totalorder %v997, 1
        %vm1002 = vcmp.eq.s32.totalorder %v998, 1
        %vm1003 = vcmp.eq.s32.totalorder %v999, 1
        %v1004 = vsel %vm1000, %v980, %v932
        %v1005 = vsel %vm1001, %v981, %v933
        %v1006 = vsel %vm1002, %v982, %v934
        %v1007 = vsel %vm1003, %v983, %v935
        %v1008 = vsel %vm1000, %v984, %v936
        %v1009 = vsel %vm1001, %v985, %v937
        %v1010 = vsel %vm1002, %v986, %v938
        %v1011 = vsel %vm1003, %v987, %v939
        %v1012 = vsel %vm1000, %v988, %v940
        %v1013 = vsel %vm1001, %v989, %v941
        %v1014 = vsel %vm1002, %v990, %v942
        %v1015 = vsel %vm1003, %v991, %v943
        %1016 = vrot.lane.b32.xlu0 %v344, 99
        %v1017 = vpop.permute.xlu0 %1016
        %1018 = vrot.lane.b32.xlu0 %v345, 99
        %v1019 = vpop.permute.xlu0 %1018
        %1020 = vrot.lane.b32.xlu0 %v346, 99
        %v1021 = vpop.permute.xlu0 %1020
        %1022 = vrot.lane.b32.xlu0 %v347, 99
        %v1023 = vpop.permute.xlu0 %1022
        %1024 = vrot.lane.b32.xlu0 %v348, 99
        %v1025 = vpop.permute.xlu0 %1024
        %1026 = vrot.lane.b32.xlu0 %v349, 99
        %v1027 = vpop.permute.xlu0 %1026
        %1028 = vrot.lane.b32.xlu0 %v350, 99
        %v1029 = vpop.permute.xlu0 %1028
        %1030 = vrot.lane.b32.xlu0 %v351, 99
        %v1031 = vpop.permute.xlu0 %1030
        %1032 = vrot.lane.b32.xlu0 %v352, 99
        %v1033 = vpop.permute.xlu0 %1032
        %1034 = vrot.lane.b32.xlu0 %v353, 99
        %v1035 = vpop.permute.xlu0 %1034
        %1036 = vrot.lane.b32.xlu0 %v354, 99
        %v1037 = vpop.permute.xlu0 %1036
        %1038 = vrot.lane.b32.xlu0 %v355, 99
        %v1039 = vpop.permute.xlu0 %1038
        %v1052 = vrot.slane %v1017, 3
        %v1053 = vrot.slane %v1019, 3
        %v1054 = vrot.slane %v1021, 3
        %v1055 = vrot.slane %v1023, 3
        %v1056 = vrot.slane %v1025, 3
        %v1057 = vrot.slane %v1027, 3
        %v1058 = vrot.slane %v1029, 3
        %v1059 = vrot.slane %v1031, 3
        %v1060 = vrot.slane %v1033, 3
        %v1061 = vrot.slane %v1035, 3
        %v1062 = vrot.slane %v1037, 3
        %v1063 = vrot.slane %v1039, 3
        %vm1064 = vcmp.eq.s32.totalorder %v279, 3
        %vm1065 = vcmp.eq.s32.totalorder %v280, 3
        %vm1066 = vcmp.eq.s32.totalorder %v281, 3
        %vm1067 = vcmp.eq.s32.totalorder %v282, 3
        %v1068 = vsel %vm1064, 1, 0
        %v1069 = vsel %vm1065, 1, 0
        %v1070 = vsel %vm1066, 1, 0
        %v1071 = vsel %vm1067, 1, 0
        %vm1072 = vcmp.eq.s32.totalorder %v1068, 1
        %vm1073 = vcmp.eq.s32.totalorder %v1069, 1
        %vm1074 = vcmp.eq.s32.totalorder %v1070, 1
        %vm1075 = vcmp.eq.s32.totalorder %v1071, 1
        %v1076 = vsel %vm1072, %v1052, %v1004
        %v1077 = vsel %vm1073, %v1053, %v1005
        %v1078 = vsel %vm1074, %v1054, %v1006
        %v1079 = vsel %vm1075, %v1055, %v1007
        %v1080 = vsel %vm1072, %v1056, %v1008
        %v1081 = vsel %vm1073, %v1057, %v1009
        %v1082 = vsel %vm1074, %v1058, %v1010
        %v1083 = vsel %vm1075, %v1059, %v1011
        %v1084 = vsel %vm1072, %v1060, %v1012
        %v1085 = vsel %vm1073, %v1061, %v1013
        %v1086 = vsel %vm1074, %v1062, %v1014
        %v1087 = vsel %vm1075, %v1063, %v1015
        %1088 = vrot.lane.b32.xlu0 %v344, 100
        %v1089 = vpop.permute.xlu0 %1088
        %1090 = vrot.lane.b32.xlu0 %v345, 100
        %v1091 = vpop.permute.xlu0 %1090
        %1092 = vrot.lane.b32.xlu0 %v346, 100
        %v1093 = vpop.permute.xlu0 %1092
        %1094 = vrot.lane.b32.xlu0 %v347, 100
        %v1095 = vpop.permute.xlu0 %1094
        %1096 = vrot.lane.b32.xlu0 %v348, 100
        %v1097 = vpop.permute.xlu0 %1096
        %1098 = vrot.lane.b32.xlu0 %v349, 100
        %v1099 = vpop.permute.xlu0 %1098
        %1100 = vrot.lane.b32.xlu0 %v350, 100
        %v1101 = vpop.permute.xlu0 %1100
        %1102 = vrot.lane.b32.xlu0 %v351, 100
        %v1103 = vpop.permute.xlu0 %1102
        %1104 = vrot.lane.b32.xlu0 %v352, 100
        %v1105 = vpop.permute.xlu0 %1104
        %1106 = vrot.lane.b32.xlu0 %v353, 100
        %v1107 = vpop.permute.xlu0 %1106
        %1108 = vrot.lane.b32.xlu0 %v354, 100
        %v1109 = vpop.permute.xlu0 %1108
        %1110 = vrot.lane.b32.xlu0 %v355, 100
        %v1111 = vpop.permute.xlu0 %1110
        %v1124 = vrot.slane %v1089, 4
        %v1125 = vrot.slane %v1091, 4
        %v1126 = vrot.slane %v1093, 4
        %v1127 = vrot.slane %v1095, 4
        %v1128 = vrot.slane %v1097, 4
        %v1129 = vrot.slane %v1099, 4
        %v1130 = vrot.slane %v1101, 4
        %v1131 = vrot.slane %v1103, 4
        %v1132 = vrot.slane %v1105, 4
        %v1133 = vrot.slane %v1107, 4
        %v1134 = vrot.slane %v1109, 4
        %v1135 = vrot.slane %v1111, 4
        %vm1136 = vcmp.eq.s32.totalorder %v279, 4
        %vm1137 = vcmp.eq.s32.totalorder %v280, 4
        %vm1138 = vcmp.eq.s32.totalorder %v281, 4
        %vm1139 = vcmp.eq.s32.totalorder %v282, 4
        %v1140 = vsel %vm1136, 1, 0
        %v1141 = vsel %vm1137, 1, 0
        %v1142 = vsel %vm1138, 1, 0
        %v1143 = vsel %vm1139, 1, 0
        %vm1144 = vcmp.eq.s32.totalorder %v1140, 1
        %vm1145 = vcmp.eq.s32.totalorder %v1141, 1
        %vm1146 = vcmp.eq.s32.totalorder %v1142, 1
        %vm1147 = vcmp.eq.s32.totalorder %v1143, 1
        %v1148 = vsel %vm1144, %v1124, %v1076
        %v1149 = vsel %vm1145, %v1125, %v1077
        %v1150 = vsel %vm1146, %v1126, %v1078
        %v1151 = vsel %vm1147, %v1127, %v1079
        %v1152 = vsel %vm1144, %v1128, %v1080
        %v1153 = vsel %vm1145, %v1129, %v1081
        %v1154 = vsel %vm1146, %v1130, %v1082
        %v1155 = vsel %vm1147, %v1131, %v1083
        %v1156 = vsel %vm1144, %v1132, %v1084
        %v1157 = vsel %vm1145, %v1133, %v1085
        %v1158 = vsel %vm1146, %v1134, %v1086
        %v1159 = vsel %vm1147, %v1135, %v1087
        %1160 = vrot.lane.b32.xlu0 %v344, 101
        %v1161 = vpop.permute.xlu0 %1160
        %1162 = vrot.lane.b32.xlu0 %v345, 101
        %v1163 = vpop.permute.xlu0 %1162
        %1164 = vrot.lane.b32.xlu0 %v346, 101
        %v1165 = vpop.permute.xlu0 %1164
        %1166 = vrot.lane.b32.xlu0 %v347, 101
        %v1167 = vpop.permute.xlu0 %1166
        %1168 = vrot.lane.b32.xlu0 %v348, 101
        %v1169 = vpop.permute.xlu0 %1168
        %1170 = vrot.lane.b32.xlu0 %v349, 101
        %v1171 = vpop.permute.xlu0 %1170
        %1172 = vrot.lane.b32.xlu0 %v350, 101
        %v1173 = vpop.permute.xlu0 %1172
        %1174 = vrot.lane.b32.xlu0 %v351, 101
        %v1175 = vpop.permute.xlu0 %1174
        %1176 = vrot.lane.b32.xlu0 %v352, 101
        %v1177 = vpop.permute.xlu0 %1176
        %1178 = vrot.lane.b32.xlu0 %v353, 101
        %v1179 = vpop.permute.xlu0 %1178
        %1180 = vrot.lane.b32.xlu0 %v354, 101
        %v1181 = vpop.permute.xlu0 %1180
        %1182 = vrot.lane.b32.xlu0 %v355, 101
        %v1183 = vpop.permute.xlu0 %1182
        %v1196 = vrot.slane %v1161, 5
        %v1197 = vrot.slane %v1163, 5
        %v1198 = vrot.slane %v1165, 5
        %v1199 = vrot.slane %v1167, 5
        %v1200 = vrot.slane %v1169, 5
        %v1201 = vrot.slane %v1171, 5
        %v1202 = vrot.slane %v1173, 5
        %v1203 = vrot.slane %v1175, 5
        %v1204 = vrot.slane %v1177, 5
        %v1205 = vrot.slane %v1179, 5
        %v1206 = vrot.slane %v1181, 5
        %v1207 = vrot.slane %v1183, 5
        %vm1208 = vcmp.eq.s32.totalorder %v279, 5
        %vm1209 = vcmp.eq.s32.totalorder %v280, 5
        %vm1210 = vcmp.eq.s32.totalorder %v281, 5
        %vm1211 = vcmp.eq.s32.totalorder %v282, 5
        %v1212 = vsel %vm1208, 1, 0
        %v1213 = vsel %vm1209, 1, 0
        %v1214 = vsel %vm1210, 1, 0
        %v1215 = vsel %vm1211, 1, 0
        %vm1216 = vcmp.eq.s32.totalorder %v1212, 1
        %vm1217 = vcmp.eq.s32.totalorder %v1213, 1
        %vm1218 = vcmp.eq.s32.totalorder %v1214, 1
        %vm1219 = vcmp.eq.s32.totalorder %v1215, 1
        %v1220 = vsel %vm1216, %v1196, %v1148
        %v1221 = vsel %vm1217, %v1197, %v1149
        %v1222 = vsel %vm1218, %v1198, %v1150
        %v1223 = vsel %vm1219, %v1199, %v1151
        %v1224 = vsel %vm1216, %v1200, %v1152
        %v1225 = vsel %vm1217, %v1201, %v1153
        %v1226 = vsel %vm1218, %v1202, %v1154
        %v1227 = vsel %vm1219, %v1203, %v1155
        %v1228 = vsel %vm1216, %v1204, %v1156
        %v1229 = vsel %vm1217, %v1205, %v1157
        %v1230 = vsel %vm1218, %v1206, %v1158
        %v1231 = vsel %vm1219, %v1207, %v1159
        %1232 = vrot.lane.b32.xlu0 %v344, 102
        %v1233 = vpop.permute.xlu0 %1232
        %1234 = vrot.lane.b32.xlu0 %v345, 102
        %v1235 = vpop.permute.xlu0 %1234
        %1236 = vrot.lane.b32.xlu0 %v346, 102
        %v1237 = vpop.permute.xlu0 %1236
        %1238 = vrot.lane.b32.xlu0 %v347, 102
        %v1239 = vpop.permute.xlu0 %1238
        %1240 = vrot.lane.b32.xlu0 %v348, 102
        %v1241 = vpop.permute.xlu0 %1240
        %1242 = vrot.lane.b32.xlu0 %v349, 102
        %v1243 = vpop.permute.xlu0 %1242
        %1244 = vrot.lane.b32.xlu0 %v350, 102
        %v1245 = vpop.permute.xlu0 %1244
        %1246 = vrot.lane.b32.xlu0 %v351, 102
        %v1247 = vpop.permute.xlu0 %1246
        %1248 = vrot.lane.b32.xlu0 %v352, 102
        %v1249 = vpop.permute.xlu0 %1248
        %1250 = vrot.lane.b32.xlu0 %v353, 102
        %v1251 = vpop.permute.xlu0 %1250
        %1252 = vrot.lane.b32.xlu0 %v354, 102
        %v1253 = vpop.permute.xlu0 %1252
        %1254 = vrot.lane.b32.xlu0 %v355, 102
        %v1255 = vpop.permute.xlu0 %1254
        %v1268 = vrot.slane %v1233, 6
        %v1269 = vrot.slane %v1235, 6
        %v1270 = vrot.slane %v1237, 6
        %v1271 = vrot.slane %v1239, 6
        %v1272 = vrot.slane %v1241, 6
        %v1273 = vrot.slane %v1243, 6
        %v1274 = vrot.slane %v1245, 6
        %v1275 = vrot.slane %v1247, 6
        %v1276 = vrot.slane %v1249, 6
        %v1277 = vrot.slane %v1251, 6
        %v1278 = vrot.slane %v1253, 6
        %v1279 = vrot.slane %v1255, 6
        %vm1280 = vcmp.eq.s32.totalorder %v279, 6
        %vm1281 = vcmp.eq.s32.totalorder %v280, 6
        %vm1282 = vcmp.eq.s32.totalorder %v281, 6
        %vm1283 = vcmp.eq.s32.totalorder %v282, 6
        %v1284 = vsel %vm1280, 1, 0
        %v1285 = vsel %vm1281, 1, 0
        %v1286 = vsel %vm1282, 1, 0
        %v1287 = vsel %vm1283, 1, 0
        %vm1288 = vcmp.eq.s32.totalorder %v1284, 1
        %vm1289 = vcmp.eq.s32.totalorder %v1285, 1
        %vm1290 = vcmp.eq.s32.totalorder %v1286, 1
        %vm1291 = vcmp.eq.s32.totalorder %v1287, 1
        %v1292 = vsel %vm1288, %v1268, %v1220
        %v1293 = vsel %vm1289, %v1269, %v1221
        %v1294 = vsel %vm1290, %v1270, %v1222
        %v1295 = vsel %vm1291, %v1271, %v1223
        %v1296 = vsel %vm1288, %v1272, %v1224
        %v1297 = vsel %vm1289, %v1273, %v1225
        %v1298 = vsel %vm1290, %v1274, %v1226
        %v1299 = vsel %vm1291, %v1275, %v1227
        %v1300 = vsel %vm1288, %v1276, %v1228
        %v1301 = vsel %vm1289, %v1277, %v1229
        %v1302 = vsel %vm1290, %v1278, %v1230
        %v1303 = vsel %vm1291, %v1279, %v1231
        %1304 = vrot.lane.b32.xlu0 %v344, 103
        %v1305 = vpop.permute.xlu0 %1304
        %1306 = vrot.lane.b32.xlu0 %v345, 103
        %v1307 = vpop.permute.xlu0 %1306
        %1308 = vrot.lane.b32.xlu0 %v346, 103
        %v1309 = vpop.permute.xlu0 %1308
        %1310 = vrot.lane.b32.xlu0 %v347, 103
        %v1311 = vpop.permute.xlu0 %1310
        %1312 = vrot.lane.b32.xlu0 %v348, 103
        %v1313 = vpop.permute.xlu0 %1312
        %1314 = vrot.lane.b32.xlu0 %v349, 103
        %v1315 = vpop.permute.xlu0 %1314
        %1316 = vrot.lane.b32.xlu0 %v350, 103
        %v1317 = vpop.permute.xlu0 %1316
        %1318 = vrot.lane.b32.xlu0 %v351, 103
        %v1319 = vpop.permute.xlu0 %1318
        %1320 = vrot.lane.b32.xlu0 %v352, 103
        %v1321 = vpop.permute.xlu0 %1320
        %1322 = vrot.lane.b32.xlu0 %v353, 103
        %v1323 = vpop.permute.xlu0 %1322
        %1324 = vrot.lane.b32.xlu0 %v354, 103
        %v1325 = vpop.permute.xlu0 %1324
        %1326 = vrot.lane.b32.xlu0 %v355, 103
        %v1327 = vpop.permute.xlu0 %1326
        %v1340 = vrot.slane %v1305, 7
        %v1341 = vrot.slane %v1307, 7
        %v1342 = vrot.slane %v1309, 7
        %v1343 = vrot.slane %v1311, 7
        %v1344 = vrot.slane %v1313, 7
        %v1345 = vrot.slane %v1315, 7
        %v1346 = vrot.slane %v1317, 7
        %v1347 = vrot.slane %v1319, 7
        %v1348 = vrot.slane %v1321, 7
        %v1349 = vrot.slane %v1323, 7
        %v1350 = vrot.slane %v1325, 7
        %v1351 = vrot.slane %v1327, 7
        %vm1352 = vcmp.eq.s32.totalorder %v279, 7
        %vm1353 = vcmp.eq.s32.totalorder %v280, 7
        %vm1354 = vcmp.eq.s32.totalorder %v281, 7
        %vm1355 = vcmp.eq.s32.totalorder %v282, 7
        %v1356 = vsel %vm1352, 1, 0
        %v1357 = vsel %vm1353, 1, 0
        %v1358 = vsel %vm1354, 1, 0
        %v1359 = vsel %vm1355, 1, 0
        %vm1360 = vcmp.eq.s32.totalorder %v1356, 1
        %vm1361 = vcmp.eq.s32.totalorder %v1357, 1
        %vm1362 = vcmp.eq.s32.totalorder %v1358, 1
        %vm1363 = vcmp.eq.s32.totalorder %v1359, 1
        %v1364 = vsel %vm1360, %v1340, %v1292
        %v1365 = vsel %vm1361, %v1341, %v1293
        %v1366 = vsel %vm1362, %v1342, %v1294
        %v1367 = vsel %vm1363, %v1343, %v1295
        %v1368 = vsel %vm1360, %v1344, %v1296
        %v1369 = vsel %vm1361, %v1345, %v1297
        %v1370 = vsel %vm1362, %v1346, %v1298
        %v1371 = vsel %vm1363, %v1347, %v1299
        %v1372 = vsel %vm1360, %v1348, %v1300
        %v1373 = vsel %vm1361, %v1349, %v1301
        %v1374 = vsel %vm1362, %v1350, %v1302
        %v1375 = vsel %vm1363, %v1351, %v1303
        %vm1376 = vcmask 261120
        %1377 = vst.msk [vmem:[%s226] sm:$0xff] %vm1376, %v1364
        %1378 = vst.msk [vmem:[%s226 + $0x8] sm:$0xff] %vm1376, %v1365
        %1379 = vst.msk [vmem:[%s226 + $0x10] sm:$0xff] %vm1376, %v1366
        %1380 = vst.msk [vmem:[%s226 + $0x18] sm:$0xff] %vm1376, %v1367
        %1381 = vst.msk [vmem:[%s226 + $0x20] sm:$0xff] %vm1376, %v1368
        %1382 = vst.msk [vmem:[%s226 + $0x28] sm:$0xff] %vm1376, %v1369
        %1383 = vst.msk [vmem:[%s226 + $0x30] sm:$0xff] %vm1376, %v1370
        %1384 = vst.msk [vmem:[%s226 + $0x38] sm:$0xff] %vm1376, %v1371
        %1385 = vst.msk [vmem:[%s226 + $0x40] sm:$0xff] %vm1376, %v1372
        %1386 = vst.msk [vmem:[%s226 + $0x48] sm:$0xff] %vm1376, %v1373
        %1387 = vst.msk [vmem:[%s226 + $0x50] sm:$0xff] %vm1376, %v1374
        %1388 = vst.msk [vmem:[%s226 + $0x58] sm:$0xff] %vm1376, %v1375
        %s1389 = sand.u32 %s100, 1
        %s1390 = scalar_lea.sflag [#allocation4], %s1389
        %s1391 = sand.u32 %s100, 1
        %s1392 = smul.addr %s1391, 96
        %s1393 = scalar_lea.vmem [#allocation7], %s1392
        // Predicated region
        $region37: #{tpu_custom_call.1} parent=27 // pred_check
          %p1394 = pneg %p110
        $region38: #{tpu_custom_call.1} parent=27 // pred_check_branch
          %1396 = sbr.rel (%p1394) target = $region40
        $region39: #{tpu_custom_call.1} parent=27 // pred_region
          %s1397 = smul.u32 4, %s27
          %1399 = vsyncadd %s1390, 0
          %s1400 = smul.addr %s26, 12
          %s1401 = sadd.s32 %s1397, %s1400
          %s1402 = smul.addr %s1401, 8
          %s1403 = scalar_lea.hbm %s2, %s1402
          %s1404 = sshll.u32 %s1393, 4
          %s1405 = int_to_ptr.vmem [resolvable:$true] %s1404
          %s1406 = sshll.u32 %s1403, 4
          %s1407 = int_to_ptr.hbm [resolvable:$true] %s1406
          %1412 = dma.vmem_to_hbm [thread:$0]  %s1405, 1536, %s1407, %s1390, 128, 128, 8
        $region40: #{tpu_custom_call.1} parent=27 // pred_fallthru
          _
      $region28: #{tpu_custom_call.1} parent=5 // pred_fallthru
        _
      %p1413 = scmp.le.s32.totalorder 2, %s17
      // Predicated region
      $region41: #{tpu_custom_call.1} parent=5 // pred_check
        %p1414 = pneg %p1413
      $region42: #{tpu_custom_call.1} parent=5 // pred_check_branch
        %1416 = sbr.rel (%p1414) target = $region44
      $region43: #{tpu_custom_call.1} parent=5 // pred_region
        %s1417 = ssub.s32 %s17, 2
        // Predicated region
        $region45: #{tpu_custom_call.1} parent=43 // pred_check
          %p1418 = pneg %p116
        $region46: #{tpu_custom_call.1} parent=43 // pred_check_branch
          %1420 = sbr.rel (%p1418) target = $region48
        $region47: #{tpu_custom_call.1} parent=43 // pred_region
          %s1421 = sand.u32 %s101, 1
          %s1422 = scalar_lea.sflag [#allocation4], %s1421
          %s1423 = sand.u32 %s101, 1
          %s1424 = smul.addr %s1423, 96
          %s1425 = scalar_lea.vmem [#allocation7], %s1424
          %1427 = dma.done %s1422, 1536
        $region48: #{tpu_custom_call.1} parent=43 // pred_fallthru
          _
      $region44: #{tpu_custom_call.1} parent=5 // pred_fallthru
        _
    $region6: #{tpu_custom_call.1} parent=1 // loop_footer
      %s21 = sadd.s32 1, %s17
    $region7: #{tpu_custom_call.1} parent=1 // loop_footer_branch
      %16 = sbr.rel target = $region3
    $region8: #{tpu_custom_call.1} parent=1 // loop_exit
      _
    %1428 = vsyncpa [#allocation3], 1
    %s1429 = scalar_lea.sflag [#allocation3], 1
    %1430 = vsyncpa %s1429, 1
    %1431 = vsyncpa [#allocation6], 1
    %s1432 = scalar_lea.sflag [#allocation6], 1
    %1433 = vsyncpa %s1432, 1
    %1434 = vsyncpa [#allocation4], 1
    %s1435 = scalar_lea.sflag [#allocation4], 1
    %1436 = vsyncpa %s1435, 1

</llo_original>
